<compile_context>
chip_gen: v7x
topology: tpu7x:2x2x1
jax: 0.10.0
libtpu: 0.0.40
codegen_flags: <defaults>
</compile_context>

<pallas_src>
import jax
import jax.numpy as jnp
from jax.experimental import pallas as pl
from jax.experimental.pallas import tpu as pltpu

_VMEM_LIMIT = 48 * 1024 * 1024  # safe on v5e/v6e (128 MiB) and v7x (64 MiB) physical VMEM


def _pick_tile(n, cap=512):
    """Largest 128-multiple tile <= cap that divides n, else the full extent."""
    for t in (512, 384, 256, 128):
        if t <= cap and n % t == 0:
            return t
    return n


# ----------------------------------------------------------------------------
# Kernel 1: 1x1x1 conv projections (channel matmuls), computed once per N-tile.
# ----------------------------------------------------------------------------
def _proj_kernel(x_ref,                       # VMEM (1, C, TN)   f32
                 wq_ref, bq_ref,              # VMEM (C8p, C), (C8p, 1)
                 wk_ref, bk_ref,              # VMEM (C8p, C), (C8p, 1)
                 wv_ref, bv_ref,              # VMEM (C,   C), (C,   1)
                 q_ref,                       # VMEM (1, C8p, TN) bf16  (channel-first)
                 k_ref,                       # VMEM (1, TN, C8p) bf16  (row layout)
                 v_ref):                      # VMEM (1, C, TN)   bf16  (channel-first)
    x = x_ref[0]                                                        # (C, TN)
    qT = jnp.dot(wq_ref[...], x, preferred_element_type=jnp.float32) + bq_ref[...]
    kT = jnp.dot(wk_ref[...], x, preferred_element_type=jnp.float32) + bk_ref[...]
    vT = jnp.dot(wv_ref[...], x, preferred_element_type=jnp.float32) + bv_ref[...]
    q_ref[0] = qT.astype(q_ref.dtype)                                   # (C8p, TN)
    k_ref[0] = kT.T.astype(k_ref.dtype)                                 # (TN, C8p)
    v_ref[0] = vT.astype(v_ref.dtype)                                   # (C, TN)


# ----------------------------------------------------------------------------
# Kernel 2: flash-style attention with online softmax + residual.
#   Layouts chosen so both MXU matmuls are plain A@B (no in-loop transposes):
#     s^T (TK,TQ) = K_row (TK,C8p) @ Q_cf (C8p,TQ)
#     acc (C,TQ) += V_cf (C,TK)    @ p^T (TK,TQ)
# ----------------------------------------------------------------------------
def _flash_kernel(gamma_ref,                  # SMEM (1,)
                  q_ref,                      # VMEM (1, C8p, TQ) bf16
                  k_ref,                      # VMEM (1, TK, C8p) bf16
                  v_ref,                      # VMEM (1, C,  TK)  bf16
                  x_ref,                      # VMEM (1, C,  TQ)  f32 (residual)
                  o_ref,                      # VMEM (1, C,  TQ)  f32
                  m_sc, l_sc, acc_sc):        # VMEM (1,TQ), (1,TQ), (C,TQ) f32
    ki = pl.program_id(2)

    @pl.when(ki == 0)
    def _init():
        m_sc[...] = jnp.full(m_sc.shape, -jnp.inf, dtype=m_sc.dtype)
        l_sc[...] = jnp.zeros(l_sc.shape, dtype=l_sc.dtype)
        acc_sc[...] = jnp.zeros(acc_sc.shape, dtype=acc_sc.dtype)

    # energy^T tile: s[tk, tq] = <k_tk, q_tq>  (padded head lanes contribute 0)
    s = jnp.dot(k_ref[0], q_ref[0], preferred_element_type=jnp.float32)  # (TK, TQ) f32

    m_prev = m_sc[...]                                                   # (1, TQ)
    m_new = jnp.maximum(m_prev, jnp.max(s, axis=0, keepdims=True))       # (1, TQ)
    alpha = jnp.exp(m_prev - m_new)                                      # (1, TQ)
    p = jnp.exp(s - m_new)                                               # (TK, TQ) f32
    l_sc[...] = alpha * l_sc[...] + jnp.sum(p, axis=0, keepdims=True)
    acc_sc[...] = alpha * acc_sc[...] + jnp.dot(
        v_ref[0], p.astype(jnp.bfloat16), preferred_element_type=jnp.float32)
    m_sc[...] = m_new

    @pl.when(ki == pl.num_programs(2) - 1)
    def _finalize():
        # deferred softmax normalization: one multiply on the (C,TQ) result
        inv_l = pl.reciprocal(l_sc[...], approx=True)                    # (1, TQ) via EUP
        out = gamma_ref[0] * (acc_sc[...] * inv_l) + x_ref[0]
        o_ref[0] = out.astype(o_ref.dtype)


# ----------------------------------------------------------------------------
# Wrapper
# ----------------------------------------------------------------------------
def self_attention_3d(x, wq, bq, wk, bk, wv, bv, gamma):
    """x: (B, C, D, H, W) f32; conv weights in PyTorch layout (Cout, Cin, 1, 1, 1);
    biases (Cout,); gamma array of shape (1,)."""
    B, C, D, H, W = x.shape
    C8 = C // 8
    N = D * H * W
    C8p = max(128, ((C8 + 127) // 128) * 128)   # lane-pad the head dim to 128 multiple

    # Free reshape only — kernels consume/produce channel-first (B, C, N) directly,
    # so there are no HBM transpose passes in the wrapper.
    x_cn = x.reshape(B, C, N).astype(jnp.float32)

    # Conv kernels (Cout, Cin, 1, 1, 1) -> (Cout, Cin) matmul weights; zero-pad the
    # query/key output channels to C8p (zero rows/bias do not change q.k).
    wqT = jnp.zeros((C8p, C), jnp.float32).at[:C8].set(wq.reshape(C8, C))
    wkT = jnp.zeros((C8p, C), jnp.float32).at[:C8].set(wk.reshape(C8, C))
    wvT = wv.reshape(C, C).astype(jnp.float32)
    bq2 = jnp.zeros((C8p, 1), jnp.float32).at[:C8, 0].set(bq.astype(jnp.float32))
    bk2 = jnp.zeros((C8p, 1), jnp.float32).at[:C8, 0].set(bk.astype(jnp.float32))
    bv2 = bv.reshape(C, 1).astype(jnp.float32)
    gamma1 = gamma.reshape(1).astype(jnp.float32)

    TN = _pick_tile(N)
    TQ = _pick_tile(N)
    TK = _pick_tile(N)

    const = lambda shape: pl.BlockSpec(shape, lambda *_: tuple(0 for _ in shape))

    # --- stage 1: Q / K / V projections (computed once, not per query tile) ---
    q_cf, k_row, v_cf = pl.pallas_call(
        _proj_kernel,
        out_shape=(jax.ShapeDtypeStruct((B, C8p, N), jnp.bfloat16),
                   jax.ShapeDtypeStruct((B, N, C8p), jnp.bfloat16),
                   jax.ShapeDtypeStruct((B, C, N), jnp.bfloat16)),
        grid=(B, N // TN),
        in_specs=[
            pl.BlockSpec((1, C, TN), lambda b, n: (b, 0, n)),     # x tile
            const((C8p, C)), const((C8p, 1)),                     # Wq, bq
            const((C8p, C)), const((C8p, 1)),                     # Wk, bk
            const((C, C)), const((C, 1)),                         # Wv, bv
        ],
        out_specs=[
            pl.BlockSpec((1, C8p, TN), lambda b, n: (b, 0, n)),   # Q (channel-first)
            pl.BlockSpec((1, TN, C8p), lambda b, n: (b, n, 0)),   # K (row layout)
            pl.BlockSpec((1, C, TN), lambda b, n: (b, 0, n)),     # V (channel-first)
        ],
        compiler_params=pltpu.CompilerParams(
            dimension_semantics=("parallel", "parallel"),
            vmem_limit_bytes=_VMEM_LIMIT),
    )(x_cn, wqT, bq2, wkT, bk2, wvT, bv2)

    # --- stage 2: flash attention + gamma * out + x, output already (B, C, N) ---
    out_cn = pl.pallas_call(
        _flash_kernel,
        out_shape=jax.ShapeDtypeStruct((B, C, N), jnp.float32),
        grid=(B, N // TQ, N // TK),
        in_specs=[
            pl.BlockSpec(memory_space=pltpu.MemorySpace.SMEM),              # gamma
            pl.BlockSpec((1, C8p, TQ), lambda b, qi, ki: (b, 0, qi)),       # Q tile
            pl.BlockSpec((1, TK, C8p), lambda b, qi, ki: (b, ki, 0)),       # K tile
            pl.BlockSpec((1, C, TK), lambda b, qi, ki: (b, 0, ki)),         # V tile
            pl.BlockSpec((1, C, TQ), lambda b, qi, ki: (b, 0, qi)),         # x residual
        ],
        out_specs=pl.BlockSpec((1, C, TQ), lambda b, qi, ki: (b, 0, qi)),
        scratch_shapes=[
            pltpu.VMEM((1, TQ), jnp.float32),    # running max  m
            pltpu.VMEM((1, TQ), jnp.float32),    # running sum  l
            pltpu.VMEM((C, TQ), jnp.float32),    # unnormalized accumulator
        ],
        compiler_params=pltpu.CompilerParams(
            dimension_semantics=("parallel", "parallel", "arbitrary"),
            vmem_limit_bytes=_VMEM_LIMIT),
    )(gamma1, q_cf, k_row, v_cf, x_cn)

    return out_cn.reshape(B, C, D, H, W)


def _reference(x, wq, bq, wk, bk, wv, bv, gamma):
    """Pure-JAX replica of the PyTorch forward for verification."""
    B, C, D, H, W = x.shape
    C8 = C // 8
    N = D * H * W
    xf = x.reshape(B, C, N)
    q = jnp.einsum("oc,bcn->bon", wq.reshape(C8, C), xf) + bq[None, :, None]
    k = jnp.einsum("oc,bcn->bon", wk.reshape(C8, C), xf) + bk[None, :, None]
    v = jnp.einsum("oc,bcn->bon", wv.reshape(C, C), xf) + bv[None, :, None]
    energy = jnp.einsum("bcn,bcm->bnm", q, k)                 # Q^T K
    attn = jax.nn.softmax(energy, axis=-1)
    out = jnp.einsum("bcm,bnm->bcn", v, attn)                 # V @ attn^T
    out = out.reshape(B, C, D, H, W)
    return gamma.reshape(()) * out + x


if __name__ == "__main__":
    # Small but tiling-exercising shapes: N = D*H*W = 1024 -> 2x2 query/KV tiles.
    B, C, D, H, W = 2, 16, 8, 8, 16
    C8 = C // 8

    key = jax.random.PRNGKey(0)
    ks = jax.random.split(key, 8)
    x = jax.random.normal(ks[0], (B, C, D, H, W), dtype=jnp.float32)
    wq = jax.random.normal(ks[1], (C8, C, 1, 1, 1), dtype=jnp.float32) * 0.1
    bq = jax.random.normal(ks[2], (C8,), dtype=jnp.float32) * 0.1
    wk = jax.random.normal(ks[3], (C8, C, 1, 1, 1), dtype=jnp.float32) * 0.1
    bk = jax.random.normal(ks[4], (C8,), dtype=jnp.float32) * 0.1
    wv = jax.random.normal(ks[5], (C, C, 1, 1, 1), dtype=jnp.float32) * 0.1
    bv = jax.random.normal(ks[6], (C,), dtype=jnp.float32) * 0.1
    # nn.Parameter(torch.zeros(1)) -> gamma starts at 0; use nonzero so the
    # attention path is actually exercised by the check.
    gamma = jnp.asarray([0.5], dtype=jnp.float32)

    out = self_attention_3d(x, wq, bq, wk, bk, wv, bv, gamma)
    out = jax.block_until_ready(out)

    ref = _reference(x, wq, bq, wk, bk, wv, bv, gamma)
    assert out.shape == (B, C, D, H, W)
    # bf16 MXU feeds + approx reciprocal -> relaxed (but still tight) tolerance.
    assert jnp.allclose(out, ref, atol=3e-2, rtol=3e-2), "mismatch vs reference"

    print("KERNEL_OK")
</pallas_src>

<mosaic_0001>
module attributes {stable_mosaic.version = 11 : i64} {
  func.func @_proj_kernel(%arg0: i32, %arg1: i32, %arg2: memref<1x16x512xf32, #tpu.memory_space<vmem>>, %arg3: memref<128x16xf32, #tpu.memory_space<vmem>>, %arg4: memref<128x1xf32, #tpu.memory_space<vmem>>, %arg5: memref<128x16xf32, #tpu.memory_space<vmem>>, %arg6: memref<128x1xf32, #tpu.memory_space<vmem>>, %arg7: memref<16x16xf32, #tpu.memory_space<vmem>>, %arg8: memref<16x1xf32, #tpu.memory_space<vmem>>, %arg9: memref<1x128x512xbf16, #tpu.memory_space<vmem>>, %arg10: memref<1x512x128xbf16, #tpu.memory_space<vmem>>, %arg11: memref<1x16x512xbf16, #tpu.memory_space<vmem>>) attributes {dimension_semantics = [#tpu.dimension_semantics<parallel>, #tpu.dimension_semantics<parallel>], iteration_bounds = array<i64: 2, 2>, scalar_prefetch = 0 : i64, scratch_operands = 0 : i64, tpu.core_type = #tpu.core_type<tc>, window_params = [{transform_indices = @transform_0, window_bounds = array<i64: 1, 16, 512>}, {pipeline_mode = #tpu.pipeline_mode<synchronous>, transform_indices = @transform_1, window_bounds = array<i64: 128, 16>}, {pipeline_mode = #tpu.pipeline_mode<synchronous>, transform_indices = @transform_2, window_bounds = array<i64: 128, 1>}, {pipeline_mode = #tpu.pipeline_mode<synchronous>, transform_indices = @transform_3, window_bounds = array<i64: 128, 16>}, {pipeline_mode = #tpu.pipeline_mode<synchronous>, transform_indices = @transform_4, window_bounds = array<i64: 128, 1>}, {pipeline_mode = #tpu.pipeline_mode<synchronous>, transform_indices = @transform_5, window_bounds = array<i64: 16, 16>}, {pipeline_mode = #tpu.pipeline_mode<synchronous>, transform_indices = @transform_6, window_bounds = array<i64: 16, 1>}, {transform_indices = @transform_7, window_bounds = array<i64: 1, 128, 512>}, {transform_indices = @transform_8, window_bounds = array<i64: 1, 512, 128>}, {transform_indices = @transform_9, window_bounds = array<i64: 1, 16, 512>}]} {
    %c0 = arith.constant 0 : index
    %c0_0 = arith.constant 0 : index
    %c0_1 = arith.constant 0 : index
    %0 = vector.load %arg2[%c0, %c0_0, %c0_1] : memref<1x16x512xf32, #tpu.memory_space<vmem>>, vector<1x16x512xf32>
    %1 = vector.shape_cast %0 : vector<1x16x512xf32> to vector<16x512xf32>
    %c0_2 = arith.constant 0 : index
    %c0_3 = arith.constant 0 : index
    %2 = vector.load %arg3[%c0_2, %c0_3] : memref<128x16xf32, #tpu.memory_space<vmem>>, vector<128x16xf32>
    %cst = arith.constant dense<0.000000e+00> : vector<128x512xf32>
    %3 = tpu.matmul %2, %1, %cst {dimension_numbers = #tpu.dot_dimension_numbers<[1], [0], [0], [1], [0, 0, 1, 1], [], []>} : vector<128x16xf32>, vector<16x512xf32>, vector<128x512xf32> -> vector<128x512xf32>
    %c0_4 = arith.constant 0 : index
    %c0_5 = arith.constant 0 : index
    %4 = vector.load %arg4[%c0_4, %c0_5] : memref<128x1xf32, #tpu.memory_space<vmem>>, vector<128x1xf32>
    %5 = vector.broadcast %4 : vector<128x1xf32> to vector<128x512xf32>
    %6 = arith.addf %3, %5 : vector<128x512xf32>
    %c0_6 = arith.constant 0 : index
    %c0_7 = arith.constant 0 : index
    %7 = vector.load %arg5[%c0_6, %c0_7] : memref<128x16xf32, #tpu.memory_space<vmem>>, vector<128x16xf32>
    %cst_8 = arith.constant dense<0.000000e+00> : vector<128x512xf32>
    %8 = tpu.matmul %7, %1, %cst_8 {dimension_numbers = #tpu.dot_dimension_numbers<[1], [0], [0], [1], [0, 0, 1, 1], [], []>} : vector<128x16xf32>, vector<16x512xf32>, vector<128x512xf32> -> vector<128x512xf32>
    %c0_9 = arith.constant 0 : index
    %c0_10 = arith.constant 0 : index
    %9 = vector.load %arg6[%c0_9, %c0_10] : memref<128x1xf32, #tpu.memory_space<vmem>>, vector<128x1xf32>
    %10 = vector.broadcast %9 : vector<128x1xf32> to vector<128x512xf32>
    %11 = arith.addf %8, %10 : vector<128x512xf32>
    %c0_11 = arith.constant 0 : index
    %c0_12 = arith.constant 0 : index
    %12 = vector.load %arg7[%c0_11, %c0_12] : memref<16x16xf32, #tpu.memory_space<vmem>>, vector<16x16xf32>
    %cst_13 = arith.constant dense<0.000000e+00> : vector<16x512xf32>
    %13 = tpu.matmul %12, %1, %cst_13 {dimension_numbers = #tpu.dot_dimension_numbers<[1], [0], [0], [1], [0, 0, 1, 1], [], []>} : vector<16x16xf32>, vector<16x512xf32>, vector<16x512xf32> -> vector<16x512xf32>
    %c0_14 = arith.constant 0 : index
    %c0_15 = arith.constant 0 : index
    %14 = vector.load %arg8[%c0_14, %c0_15] : memref<16x1xf32, #tpu.memory_space<vmem>>, vector<16x1xf32>
    %15 = vector.broadcast %14 : vector<16x1xf32> to vector<16x512xf32>
    %16 = arith.addf %13, %15 : vector<16x512xf32>
    %17 = arith.truncf %6 : vector<128x512xf32> to vector<128x512xbf16>
    %c0_16 = arith.constant 0 : index
    %c0_17 = arith.constant 0 : index
    %c0_18 = arith.constant 0 : index
    %18 = vector.load %arg9[%c0_16, %c0_17, %c0_18] : memref<1x128x512xbf16, #tpu.memory_space<vmem>>, vector<1x128x512xbf16>
    %19 = vector.shape_cast %18 : vector<1x128x512xbf16> to vector<128x512xbf16>
    %20 = vector.shape_cast %17 : vector<128x512xbf16> to vector<1x128x512xbf16>
    tpu.vector_store %arg9[%c0_16, %c0_17, %c0_18], %20 {strides = array<i32>} : memref<1x128x512xbf16, #tpu.memory_space<vmem>>, vector<1x128x512xbf16>,
    %21 = tpu.transpose %11, [1, 0] : vector<128x512xf32> -> vector<512x128xf32>
    %22 = arith.truncf %21 : vector<512x128xf32> to vector<512x128xbf16>
    %c0_19 = arith.constant 0 : index
    %c0_20 = arith.constant 0 : index
    %c0_21 = arith.constant 0 : index
    %23 = vector.load %arg10[%c0_19, %c0_20, %c0_21] : memref<1x512x128xbf16, #tpu.memory_space<vmem>>, vector<1x512x128xbf16>
    %24 = vector.shape_cast %23 : vector<1x512x128xbf16> to vector<512x128xbf16>
    %25 = vector.shape_cast %22 : vector<512x128xbf16> to vector<1x512x128xbf16>
    tpu.vector_store %arg10[%c0_19, %c0_20, %c0_21], %25 {strides = array<i32>} : memref<1x512x128xbf16, #tpu.memory_space<vmem>>, vector<1x512x128xbf16>,
    %26 = arith.truncf %16 : vector<16x512xf32> to vector<16x512xbf16>
    %c0_22 = arith.constant 0 : index
    %c0_23 = arith.constant 0 : index
    %c0_24 = arith.constant 0 : index
    %27 = vector.load %arg11[%c0_22, %c0_23, %c0_24] : memref<1x16x512xbf16, #tpu.memory_space<vmem>>, vector<1x16x512xbf16>
    %28 = vector.shape_cast %27 : vector<1x16x512xbf16> to vector<16x512xbf16>
    %29 = vector.shape_cast %26 : vector<16x512xbf16> to vector<1x16x512xbf16>
    tpu.vector_store %arg11[%c0_22, %c0_23, %c0_24], %29 {strides = array<i32>} : memref<1x16x512xbf16, #tpu.memory_space<vmem>>, vector<1x16x512xbf16>,
    return
  }
  func.func @transform_0(%arg0: i32, %arg1: i32) -> (i32, i32, i32) {
    %c0_i32 = arith.constant 0 : i32
    %c0_i32_0 = arith.constant 0 : i32
    return %arg0, %c0_i32, %arg1 : i32, i32, i32
  }
  func.func @transform_1(%arg0: i32, %arg1: i32) -> (i32, i32) {
    %c0_i32 = arith.constant 0 : i32
    %c0_i32_0 = arith.constant 0 : i32
    %c0_i32_1 = arith.constant 0 : i32
    return %c0_i32, %c0_i32_0 : i32, i32
  }
  func.func @transform_2(%arg0: i32, %arg1: i32) -> (i32, i32) {
    %c0_i32 = arith.constant 0 : i32
    %c0_i32_0 = arith.constant 0 : i32
    %c0_i32_1 = arith.constant 0 : i32
    return %c0_i32, %c0_i32_0 : i32, i32
  }
  func.func @transform_3(%arg0: i32, %arg1: i32) -> (i32, i32) {
    %c0_i32 = arith.constant 0 : i32
    %c0_i32_0 = arith.constant 0 : i32
    %c0_i32_1 = arith.constant 0 : i32
    return %c0_i32, %c0_i32_0 : i32, i32
  }
  func.func @transform_4(%arg0: i32, %arg1: i32) -> (i32, i32) {
    %c0_i32 = arith.constant 0 : i32
    %c0_i32_0 = arith.constant 0 : i32
    %c0_i32_1 = arith.constant 0 : i32
    return %c0_i32, %c0_i32_0 : i32, i32
  }
  func.func @transform_5(%arg0: i32, %arg1: i32) -> (i32, i32) {
    %c0_i32 = arith.constant 0 : i32
    %c0_i32_0 = arith.constant 0 : i32
    %c0_i32_1 = arith.constant 0 : i32
    return %c0_i32, %c0_i32_0 : i32, i32
  }
  func.func @transform_6(%arg0: i32, %arg1: i32) -> (i32, i32) {
    %c0_i32 = arith.constant 0 : i32
    %c0_i32_0 = arith.constant 0 : i32
    %c0_i32_1 = arith.constant 0 : i32
    return %c0_i32, %c0_i32_0 : i32, i32
  }
  func.func @transform_7(%arg0: i32, %arg1: i32) -> (i32, i32, i32) {
    %c0_i32 = arith.constant 0 : i32
    %c0_i32_0 = arith.constant 0 : i32
    return %arg0, %c0_i32, %arg1 : i32, i32, i32
  }
  func.func @transform_8(%arg0: i32, %arg1: i32) -> (i32, i32, i32) {
    %c0_i32 = arith.constant 0 : i32
    %c0_i32_0 = arith.constant 0 : i32
    return %arg0, %arg1, %c0_i32 : i32, i32, i32
  }
  func.func @transform_9(%arg0: i32, %arg1: i32) -> (i32, i32, i32) {
    %c0_i32 = arith.constant 0 : i32
    %c0_i32_0 = arith.constant 0 : i32
    return %arg0, %c0_i32, %arg1 : i32, i32, i32
  }
}

</mosaic_0001>

<llo_original>
// kernel: tpu_custom_call.1
$region0: #{tpu_custom_call.1}
  #allocation0 [shape = 'u32[]', space=smem, size = 0x4, offset = 0x4, fixed_abs, tag = 'smem constant byte address 0x4 - core index']
  #allocation1 [shape = 'u32[144,128]{1,0:T(1,128)}', space=vmem, size = 0x12000, scoped, tag = 'internal scratch']
  %s0 = inlined_call_operand.vmem [shape: f32[2,16,1024], index: 0, kind: input, shape index: {}]
  %s1 = inlined_call_operand.vmem [shape: f32[128,16], index: 1, kind: input, shape index: {}]
  %s2 = inlined_call_operand.vmem [shape: f32[128,1], index: 2, kind: input, shape index: {}]
  %s3 = inlined_call_operand.vmem [shape: f32[128,16], index: 3, kind: input, shape index: {}]
  %s4 = inlined_call_operand.vmem [shape: f32[128,1], index: 4, kind: input, shape index: {}]
  %s5 = inlined_call_operand.vmem [shape: f32[16,16], index: 5, kind: input, shape index: {}]
  %s6 = inlined_call_operand.vmem [shape: f32[16,1], index: 6, kind: input, shape index: {}]
  %s7 = inlined_call_operand.hbm [shape: bf16[2,128,1024], index: 7, kind: output, shape index: {0}]
  %s8 = inlined_call_operand.hbm [shape: bf16[2,1024,128], index: 8, kind: output, shape index: {1}]
  %s9 = inlined_call_operand.hbm [shape: bf16[2,16,1024], index: 9, kind: output, shape index: {2}]
  %10 = xla_tuple %s7, %s8, %s9
  %s11 = sld [smem:[#allocation0]]
  $region100: #{tpu_custom_call.1} parent=0
    _
  %s13 = ssub.s32 1, %s11
  %s14 = scalar_select 0, %s13, %s11
  $region1: #{tpu_custom_call.1} parent=0
    #allocation2 [shape = 'u8[65536]{0}', space=vmem, size = 0x10000, scoped, tag = 'input window, operand 0']
    #allocation3 [shape = 'u8[262144]{0}', space=vmem, size = 0x40000, scoped, tag = 'output window, operand 0']
    #allocation4 [shape = 's32[2]{0}', space=sflag, size = 0x8, scoped, tag = 'scoped memory for tpu_custom_call.1']
    #allocation5 [shape = 'u8[262144]{0}', space=vmem, size = 0x40000, scoped, tag = 'output window, operand 1']
    #allocation6 [shape = 's32[2]{0}', space=sflag, size = 0x8, scoped, tag = 'scoped memory for tpu_custom_call.1']
    #allocation7 [shape = 'u8[32768]{0}', space=vmem, size = 0x8000, scoped, tag = 'output window, operand 2']
    %15 = vsyncpa [#allocation4], 0
    %s16 = scalar_lea.sflag [#allocation4], 1
    %17 = vsyncpa %s16, 0
    %18 = vsyncpa [#allocation6], 0
    %s19 = scalar_lea.sflag [#allocation6], 1
    %20 = vsyncpa %s19, 0
    loop: start=0, step=1, limit=6
    $region2: #{tpu_custom_call.1} parent=1 // loop_pre_header
      _
    $region3: #{tpu_custom_call.1} parent=1 // loop_header
      %s22 = sphi 0, %s26
      %p23 = scmp.ge.s32.totalorder %s22, 6
      %s29 = sphi 0, %s41
      %s30 = sphi 0, %s37
      %s31 = sphi 0, %s29
      %s32 = sphi 0, %s30
      %s33 = sphi 0, %s31
      %s34 = sphi 0, %s32
      %s46 = sphi 0, %s48
      %s49 = sphi 0, %s46
      %s50 = sphi 0, %s49
      %s66 = sphi 0, %s50
      %s70 = sphi 0, %s70
      %s72 = sphi 0, %s70
      %s73 = sphi 0, %s72
      %s87 = sphi 0, %s73
      %s91 = sphi 0, %s91
      %s93 = sphi 0, %s91
      %s94 = sphi 0, %s93
      %s108 = sphi 0, %s94
      %s112 = sphi 0, %s112
      %s114 = sphi 0, %s112
      %s115 = sphi 0, %s114
      %s129 = sphi 0, %s115
      %s133 = sphi 0, %s133
      %s135 = sphi 0, %s133
      %s136 = sphi 0, %s135
      %s150 = sphi 0, %s136
      %s154 = sphi 0, %s154
      %s156 = sphi 0, %s154
      %s157 = sphi 0, %s156
      %s171 = sphi 0, %s157
      %s175 = sphi 0, %s175
      %s177 = sphi 0, %s175
      %s178 = sphi 0, %s177
      %s192 = sphi 0, %s178
      %s200 = sphi 0, %s202
      %s203 = sphi 0, %s200
      %s204 = sphi 0, %s203
      %s220 = sphi 0, %s204
      %s228 = sphi 0, %s230
      %s231 = sphi 0, %s228
      %s232 = sphi 0, %s231
      %s248 = sphi 0, %s232
      %s256 = sphi 0, %s258
      %s259 = sphi 0, %s256
      %s260 = sphi 0, %s259
      %s276 = sphi 0, %s260
    $region4: #{tpu_custom_call.1} parent=1 // loop_header_branch
      %25 = sbr.rel (%p23) target = $region8
    $region5: #{tpu_custom_call.1} parent=1 // loop_body
      %s27 = ssub.s32 %s22, 1
      %s28 = ssub.s32 %s22, 2
      %s35 = sadd.s32 1, %s30
      %p36 = scmp.ge.s32.totalorder %s35, 2
      %s37 = scalar_select %p36, 0, %s35
      %s38 = sadd.s32 1, %s29
      %s39 = scalar_select %p36, %s38, %s29
      %p40 = scmp.ge.s32.totalorder %s39, 2
      %s41 = scalar_select %p40, 0, %s39
      %s42 = ssub.s32 %s29, %s41
      %s43 = ssub.s32 %s30, %s37
      %s44 = sor.u32 %s42, %s43
      %p45 = scmp.eq.s32.totalorder %s44, 0
      %s47 = sadd.s32 %s46, 1
      %s48 = scalar_select %p45, %s46, %s47
      %p51 = pneg %p45
      %p52 = scmp.eq.s32.totalorder %s22, 3
      %p53 = por %p51, %p52
      %p54 = scmp.ne.s32.totalorder %s46, %s49
      %p55 = scmp.eq.s32.totalorder %s22, 0
      %p56 = por %p54, %p55
      %p57 = scmp.ne.s32.totalorder %s46, %s49
      %p58 = scmp.eq.s32.totalorder %s27, 3
      %p59 = por %p57, %p58
      %p60 = scmp.ne.s32.totalorder %s49, %s50
      %p61 = scmp.eq.s32.totalorder %s27, 0
      %p62 = por %p60, %p61
      %p63 = scmp.ne.s32.totalorder %s49, %s50
      %p64 = scmp.eq.s32.totalorder %s28, 3
      %p65 = por %p63, %p64
      %p67 = scmp.ne.s32.totalorder %s50, %s66
      %p68 = scmp.eq.s32.totalorder %s28, 0
      %p69 = por %p67, %p68
      %s71 = sadd.s32 %s70, 1
      %p74 = scmp.eq.s32.totalorder %s22, 3
      %p75 = scmp.ne.s32.totalorder %s70, %s72
      %p76 = scmp.eq.s32.totalorder %s22, 0
      %p77 = por %p75, %p76
      %p78 = scmp.ne.s32.totalorder %s70, %s72
      %p79 = scmp.eq.s32.totalorder %s27, 3
      %p80 = por %p78, %p79
      %p81 = scmp.ne.s32.totalorder %s72, %s73
      %p82 = scmp.eq.s32.totalorder %s27, 0
      %p83 = por %p81, %p82
      %p84 = scmp.ne.s32.totalorder %s72, %s73
      %p85 = scmp.eq.s32.totalorder %s28, 3
      %p86 = por %p84, %p85
      %p88 = scmp.ne.s32.totalorder %s73, %s87
      %p89 = scmp.eq.s32.totalorder %s28, 0
      %p90 = por %p88, %p89
      %s92 = sadd.s32 %s91, 1
      %p95 = scmp.eq.s32.totalorder %s22, 3
      %p96 = scmp.ne.s32.totalorder %s91, %s93
      %p97 = scmp.eq.s32.totalorder %s22, 0
      %p98 = por %p96, %p97
      %p99 = scmp.ne.s32.totalorder %s91, %s93
      %p100 = scmp.eq.s32.totalorder %s27, 3
      %p101 = por %p99, %p100
      %p102 = scmp.ne.s32.totalorder %s93, %s94
      %p103 = scmp.eq.s32.totalorder %s27, 0
      %p104 = por %p102, %p103
      %p105 = scmp.ne.s32.totalorder %s93, %s94
      %p106 = scmp.eq.s32.totalorder %s28, 3
      %p107 = por %p105, %p106
      %p109 = scmp.ne.s32.totalorder %s94, %s108
      %p110 = scmp.eq.s32.totalorder %s28, 0
      %p111 = por %p109, %p110
      %s113 = sadd.s32 %s112, 1
      %p116 = scmp.eq.s32.totalorder %s22, 3
      %p117 = scmp.ne.s32.totalorder %s112, %s114
      %p118 = scmp.eq.s32.totalorder %s22, 0
      %p119 = por %p117, %p118
      %p120 = scmp.ne.s32.totalorder %s112, %s114
      %p121 = scmp.eq.s32.totalorder %s27, 3
      %p122 = por %p120, %p121
      %p123 = scmp.ne.s32.totalorder %s114, %s115
      %p124 = scmp.eq.s32.totalorder %s27, 0
      %p125 = por %p123, %p124
      %p126 = scmp.ne.s32.totalorder %s114, %s115
      %p127 = scmp.eq.s32.totalorder %s28, 3
      %p128 = por %p126, %p127
      %p130 = scmp.ne.s32.totalorder %s115, %s129
      %p131 = scmp.eq.s32.totalorder %s28, 0
      %p132 = por %p130, %p131
      %s134 = sadd.s32 %s133, 1
      %p137 = scmp.eq.s32.totalorder %s22, 3
      %p138 = scmp.ne.s32.totalorder %s133, %s135
      %p139 = scmp.eq.s32.totalorder %s22, 0
      %p140 = por %p138, %p139
      %p141 = scmp.ne.s32.totalorder %s133, %s135
      %p142 = scmp.eq.s32.totalorder %s27, 3
      %p143 = por %p141, %p142
      %p144 = scmp.ne.s32.totalorder %s135, %s136
      %p145 = scmp.eq.s32.totalorder %s27, 0
      %p146 = por %p144, %p145
      %p147 = scmp.ne.s32.totalorder %s135, %s136
      %p148 = scmp.eq.s32.totalorder %s28, 3
      %p149 = por %p147, %p148
      %p151 = scmp.ne.s32.totalorder %s136, %s150
      %p152 = scmp.eq.s32.totalorder %s28, 0
      %p153 = por %p151, %p152
      %s155 = sadd.s32 %s154, 1
      %p158 = scmp.eq.s32.totalorder %s22, 3
      %p159 = scmp.ne.s32.totalorder %s154, %s156
      %p160 = scmp.eq.s32.totalorder %s22, 0
      %p161 = por %p159, %p160
      %p162 = scmp.ne.s32.totalorder %s154, %s156
      %p163 = scmp.eq.s32.totalorder %s27, 3
      %p164 = por %p162, %p163
      %p165 = scmp.ne.s32.totalorder %s156, %s157
      %p166 = scmp.eq.s32.totalorder %s27, 0
      %p167 = por %p165, %p166
      %p168 = scmp.ne.s32.totalorder %s156, %s157
      %p169 = scmp.eq.s32.totalorder %s28, 3
      %p170 = por %p168, %p169
      %p172 = scmp.ne.s32.totalorder %s157, %s171
      %p173 = scmp.eq.s32.totalorder %s28, 0
      %p174 = por %p172, %p173
      %s176 = sadd.s32 %s175, 1
      %p179 = scmp.eq.s32.totalorder %s22, 3
      %p180 = scmp.ne.s32.totalorder %s175, %s177
      %p181 = scmp.eq.s32.totalorder %s22, 0
      %p182 = por %p180, %p181
      %p183 = scmp.ne.s32.totalorder %s175, %s177
      %p184 = scmp.eq.s32.totalorder %s27, 3
      %p185 = por %p183, %p184
      %p186 = scmp.ne.s32.totalorder %s177, %s178
      %p187 = scmp.eq.s32.totalorder %s27, 0
      %p188 = por %p186, %p187
      %p189 = scmp.ne.s32.totalorder %s177, %s178
      %p190 = scmp.eq.s32.totalorder %s28, 3
      %p191 = por %p189, %p190
      %p193 = scmp.ne.s32.totalorder %s178, %s192
      %p194 = scmp.eq.s32.totalorder %s28, 0
      %p195 = por %p193, %p194
      %s196 = ssub.s32 %s29, %s41
      %s197 = ssub.s32 %s30, %s37
      %s198 = sor.u32 %s196, %s197
      %p199 = scmp.eq.s32.totalorder %s198, 0
      %s201 = sadd.s32 %s200, 1
      %s202 = scalar_select %p199, %s200, %s201
      %p205 = pneg %p199
      %p206 = scmp.eq.s32.totalorder %s22, 3
      %p207 = por %p205, %p206
      %p208 = scmp.ne.s32.totalorder %s200, %s203
      %p209 = scmp.eq.s32.totalorder %s22, 0
      %p210 = por %p208, %p209
      %p211 = scmp.ne.s32.totalorder %s200, %s203
      %p212 = scmp.eq.s32.totalorder %s27, 3
      %p213 = por %p211, %p212
      %p214 = scmp.ne.s32.totalorder %s203, %s204
      %p215 = scmp.eq.s32.totalorder %s27, 0
      %p216 = por %p214, %p215
      %p217 = scmp.ne.s32.totalorder %s203, %s204
      %p218 = scmp.eq.s32.totalorder %s28, 3
      %p219 = por %p217, %p218
      %p221 = scmp.ne.s32.totalorder %s204, %s220
      %p222 = scmp.eq.s32.totalorder %s28, 0
      %p223 = por %p221, %p222
      %s224 = ssub.s32 %s29, %s41
      %s225 = ssub.s32 %s30, %s37
      %s226 = sor.u32 %s224, %s225
      %p227 = scmp.eq.s32.totalorder %s226, 0
      %s229 = sadd.s32 %s228, 1
      %s230 = scalar_select %p227, %s228, %s229
      %p233 = pneg %p227
      %p234 = scmp.eq.s32.totalorder %s22, 3
      %p235 = por %p233, %p234
      %p236 = scmp.ne.s32.totalorder %s228, %s231
      %p237 = scmp.eq.s32.totalorder %s22, 0
      %p238 = por %p236, %p237
      %p239 = scmp.ne.s32.totalorder %s228, %s231
      %p240 = scmp.eq.s32.totalorder %s27, 3
      %p241 = por %p239, %p240
      %p242 = scmp.ne.s32.totalorder %s231, %s232
      %p243 = scmp.eq.s32.totalorder %s27, 0
      %p244 = por %p242, %p243
      %p245 = scmp.ne.s32.totalorder %s231, %s232
      %p246 = scmp.eq.s32.totalorder %s28, 3
      %p247 = por %p245, %p246
      %p249 = scmp.ne.s32.totalorder %s232, %s248
      %p250 = scmp.eq.s32.totalorder %s28, 0
      %p251 = por %p249, %p250
      %s252 = ssub.s32 %s29, %s41
      %s253 = ssub.s32 %s30, %s37
      %s254 = sor.u32 %s252, %s253
      %p255 = scmp.eq.s32.totalorder %s254, 0
      %s257 = sadd.s32 %s256, 1
      %s258 = scalar_select %p255, %s256, %s257
      %p261 = pneg %p255
      %p262 = scmp.eq.s32.totalorder %s22, 3
      %p263 = por %p261, %p262
      %p264 = scmp.ne.s32.totalorder %s256, %s259
      %p265 = scmp.eq.s32.totalorder %s22, 0
      %p266 = por %p264, %p265
      %p267 = scmp.ne.s32.totalorder %s256, %s259
      %p268 = scmp.eq.s32.totalorder %s27, 3
      %p269 = por %p267, %p268
      %p270 = scmp.ne.s32.totalorder %s259, %s260
      %p271 = scmp.eq.s32.totalorder %s27, 0
      %p272 = por %p270, %p271
      %p273 = scmp.ne.s32.totalorder %s259, %s260
      %p274 = scmp.eq.s32.totalorder %s28, 3
      %p275 = por %p273, %p274
      %p277 = scmp.ne.s32.totalorder %s260, %s276
      %p278 = scmp.eq.s32.totalorder %s28, 0
      %p279 = por %p277, %p278
      %p280 = scmp.le.s32.totalorder 1, %s22
      %p281 = scmp.lt.s32.totalorder %s22, 5
      %p282 = pnand %p280, %p281
      %p283 = pneg %p282
      // Predicated region
      $region9: #{tpu_custom_call.1} parent=5 // pred_check
        _
      $region10: #{tpu_custom_call.1} parent=5 // pred_check_branch
        %285 = sbr.rel (%p282) target = $region12
      $region11: #{tpu_custom_call.1} parent=5 // pred_region
        %s286 = ssub.s32 %s22, 1
        // Predicated region
        $region13: #{tpu_custom_call.1} parent=11 // pred_check
          %p287 = pneg %p83
        $region14: #{tpu_custom_call.1} parent=11 // pred_check_branch
          %289 = sbr.rel (%p287) target = $region16
        $region15: #{tpu_custom_call.1} parent=11 // pred_region
          _
        $region16: #{tpu_custom_call.1} parent=11 // pred_fallthru
          _
        // Predicated region
        $region17: #{tpu_custom_call.1} parent=11 // pred_check
          %p290 = pneg %p104
        $region18: #{tpu_custom_call.1} parent=11 // pred_check_branch
          %292 = sbr.rel (%p290) target = $region20
        $region19: #{tpu_custom_call.1} parent=11 // pred_region
          _
        $region20: #{tpu_custom_call.1} parent=11 // pred_fallthru
          _
        // Predicated region
        $region21: #{tpu_custom_call.1} parent=11 // pred_check
          %p293 = pneg %p125
        $region22: #{tpu_custom_call.1} parent=11 // pred_check_branch
          %295 = sbr.rel (%p293) target = $region24
        $region23: #{tpu_custom_call.1} parent=11 // pred_region
          _
        $region24: #{tpu_custom_call.1} parent=11 // pred_fallthru
          _
        // Predicated region
        $region25: #{tpu_custom_call.1} parent=11 // pred_check
          %p296 = pneg %p146
        $region26: #{tpu_custom_call.1} parent=11 // pred_check_branch
          %298 = sbr.rel (%p296) target = $region28
        $region27: #{tpu_custom_call.1} parent=11 // pred_region
          _
        $region28: #{tpu_custom_call.1} parent=11 // pred_fallthru
          _
        // Predicated region
        $region29: #{tpu_custom_call.1} parent=11 // pred_check
          %p299 = pneg %p167
        $region30: #{tpu_custom_call.1} parent=11 // pred_check_branch
          %301 = sbr.rel (%p299) target = $region32
        $region31: #{tpu_custom_call.1} parent=11 // pred_region
          _
        $region32: #{tpu_custom_call.1} parent=11 // pred_fallthru
          _
        // Predicated region
        $region33: #{tpu_custom_call.1} parent=11 // pred_check
          %p302 = pneg %p188
        $region34: #{tpu_custom_call.1} parent=11 // pred_check_branch
          %304 = sbr.rel (%p302) target = $region36
        $region35: #{tpu_custom_call.1} parent=11 // pred_region
          _
        $region36: #{tpu_custom_call.1} parent=11 // pred_fallthru
          _
      $region12: #{tpu_custom_call.1} parent=5 // pred_fallthru
        _
      %p305 = scmp.lt.s32.totalorder %s22, 4
      // Predicated region
      $region37: #{tpu_custom_call.1} parent=5 // pred_check
        %p306 = pneg %p305
      $region38: #{tpu_custom_call.1} parent=5 // pred_check_branch
        %308 = sbr.rel (%p306) target = $region40
      $region39: #{tpu_custom_call.1} parent=5 // pred_region
        // Predicated region
        $region41: #{tpu_custom_call.1} parent=39 // pred_check
          %p309 = pneg %p56
        $region42: #{tpu_custom_call.1} parent=39 // pred_check_branch
          %311 = sbr.rel (%p309) target = $region44
        $region43: #{tpu_custom_call.1} parent=39 // pred_region
          %s312 = sand.u32 %s46, 1
          %s313 = sand.u32 %s46, 1
          %s314 = smul.addr %s313, 64
          %s315 = scalar_lea.vmem [#allocation2], %s314
          %s316 = smul.u32 4, %s30
          %s317 = smul.addr %s29, 16
          %s318 = sadd.s32 %s316, %s317
          %s319 = smul.addr %s318, 8
          %s320 = scalar_lea.vmem %s0, %s319
          // Predicated region
          $region45: #{tpu_custom_call.1} parent=43 // pred_check
            _
          $region46: #{tpu_custom_call.1} parent=43 // pred_check_branch
            %322 = sbr.rel (0) target = $region48
          $region47: #{tpu_custom_call.1} parent=43 // pred_region
            // Predicated region
            $region49: #{tpu_custom_call.1} parent=47 // pred_check
              _
            $region50: #{tpu_custom_call.1} parent=47 // pred_check_branch
              %324 = sbr.rel (0) target = $region52
            $region51: #{tpu_custom_call.1} parent=47 // pred_region
              loop: start=0, step=1, limit=1
              $region53: #{tpu_custom_call.1} parent=51 // loop_pre_header
                _
              $region54: #{tpu_custom_call.1} parent=51 // loop_header
                %s326 = sphi 0, %s330
                %p327 = scmp.ge.s32.totalorder %s326, 1
                %s331 = sphi %s320, %s320
                %s332 = sphi %s315, %s315
              $region55: #{tpu_custom_call.1} parent=51 // loop_header_branch
                %329 = sbr.rel (%p327) target = $region59
              $region56: #{tpu_custom_call.1} parent=51 // loop_body
                %v333 = vld [vmem:[%s331] sm:$0xff]
                %334 = vst [vmem:[%s332] sm:$0xff] %v333
                %v335 = vld [vmem:[%s331 + $0x8] sm:$0xff]
                %336 = vst [vmem:[%s332 + $0x8] sm:$0xff] %v335
                %v337 = vld [vmem:[%s331 + $0x10] sm:$0xff]
                %338 = vst [vmem:[%s332 + $0x10] sm:$0xff] %v337
                %v339 = vld [vmem:[%s331 + $0x18] sm:$0xff]
                %340 = vst [vmem:[%s332 + $0x18] sm:$0xff] %v339
                %v341 = vld [vmem:[%s331 + $0x40] sm:$0xff]
                %342 = vst [vmem:[%s332 + $0x20] sm:$0xff] %v341
                %v343 = vld [vmem:[%s331 + $0x48] sm:$0xff]
                %344 = vst [vmem:[%s332 + $0x28] sm:$0xff] %v343
                %v345 = vld [vmem:[%s331 + $0x50] sm:$0xff]
                %346 = vst [vmem:[%s332 + $0x30] sm:$0xff] %v345
                %v347 = vld [vmem:[%s331 + $0x58] sm:$0xff]
                %348 = vst [vmem:[%s332 + $0x38] sm:$0xff] %v347
              $region57: #{tpu_custom_call.1} parent=51 // loop_footer
                %s330 = sadd.s32 1, %s326
              $region58: #{tpu_custom_call.1} parent=51 // loop_footer_branch
                %325 = sbr.rel target = $region54
              $region59: #{tpu_custom_call.1} parent=51 // loop_exit
                _
            $region52: #{tpu_custom_call.1} parent=47 // pred_fallthru
              _
            // Predicated region
            $region60: #{tpu_custom_call.1} parent=47 // pred_check
              _
            $region61: #{tpu_custom_call.1} parent=47 // pred_check_branch
              %350 = sbr.rel target = $region63
            $region62: #{tpu_custom_call.1} parent=47 // pred_region
              _
            $region63: #{tpu_custom_call.1} parent=47 // pred_fallthru
              _
          $region48: #{tpu_custom_call.1} parent=43 // pred_fallthru
            _
          %351 = vnop
        $region44: #{tpu_custom_call.1} parent=39 // pred_fallthru
          _
      $region40: #{tpu_custom_call.1} parent=5 // pred_fallthru
        _
      %p352 = scmp.le.s32.totalorder 1, %s22
      %p353 = scmp.lt.s32.totalorder %s22, 5
      %p354 = pnand %p352, %p353
      %p355 = pneg %p354
      // Predicated region
      $region64: #{tpu_custom_call.1} parent=5 // pred_check
        _
      $region65: #{tpu_custom_call.1} parent=5 // pred_check_branch
        %357 = sbr.rel (%p354) target = $region67
      $region66: #{tpu_custom_call.1} parent=5 // pred_region
        %s358 = ssub.s32 %s22, 1
        %s359 = sand.u32 %s49, 1
        %s360 = sand.u32 %s49, 1
        %s361 = smul.addr %s360, 64
        %s362 = scalar_lea.vmem [#allocation2], %s361
        // Predicated region
        $region68: #{tpu_custom_call.1} parent=66 // pred_check
          %p363 = pneg %p62
        $region69: #{tpu_custom_call.1} parent=66 // pred_check_branch
          %365 = sbr.rel (%p363) target = $region71
        $region70: #{tpu_custom_call.1} parent=66 // pred_region
          _
        $region71: #{tpu_custom_call.1} parent=66 // pred_fallthru
          _
        %s366 = sand.u32 %s49, 1
        %s367 = sand.u32 %s49, 1
        %s368 = smul.addr %s367, 64
        %s369 = scalar_lea.vmem [#allocation2], %s368
        %p370 = pneg %p62
        %p371 = pneg %p59
        %p372 = pneg %p83
        %p373 = pneg %p80
        %p374 = pneg %p104
        %p375 = pneg %p101
        %p376 = pneg %p125
        %p377 = pneg %p122
        %p378 = pneg %p146
        %p379 = pneg %p143
        %p380 = pneg %p167
        %p381 = pneg %p164
        %p382 = pneg %p188
        %p383 = pneg %p185
        %p384 = pneg %p216
        %p385 = pneg %p213
        %s386 = sand.u32 %s203, 1
        %s387 = scalar_lea.sflag [#allocation4], %s386
        %s388 = sand.u32 %s203, 1
        %s389 = smul.addr %s388, 256
        %s390 = scalar_lea.vmem [#allocation3], %s389
        %p391 = pneg %p244
        %p392 = pneg %p241
        %s393 = sand.u32 %s27, 1
        %s394 = scalar_lea.sflag [#allocation6], %s393
        %s395 = sand.u32 %s231, 1
        %s396 = smul.addr %s395, 256
        %s397 = scalar_lea.vmem [#allocation5], %s396
        %p398 = pneg %p272
        %p399 = pneg %p269
        %s400 = sand.u32 %s27, 1
        %s401 = scalar_lea.sflag [#allocation6], %s400
        %s402 = sand.u32 %s259, 1
        %s403 = smul.addr %s402, 32
        %s404 = scalar_lea.vmem [#allocation7], %s403
        %s405 = smul.u32 4, %s32
        %s406 = smul.u32 4, %s32
        %s407 = smul.u32 64, %s32
        %s408 = smul.u32 4, %s32
        %v409 = vld [vmem:[%s362] sm:$0xff]
        %v410 = vld [vmem:[%s362 + $0x8] sm:$0xff]
        %v411 = vld [vmem:[%s362 + $0x10] sm:$0xff]
        %v412 = vld [vmem:[%s362 + $0x18] sm:$0xff]
        %v413 = vld [vmem:[%s362 + $0x20] sm:$0xff]
        %v414 = vld [vmem:[%s362 + $0x28] sm:$0xff]
        %v415 = vld [vmem:[%s362 + $0x30] sm:$0xff]
        %v416 = vld [vmem:[%s362 + $0x38] sm:$0xff]
        %v417 = vld [vmem:[%s1] sm:$0xff]
        %v418 = vld [vmem:[%s1 + $0x8] sm:$0xff]
        %v419 = vld [vmem:[%s1 + $0x10] sm:$0xff]
        %v420 = vld [vmem:[%s1 + $0x18] sm:$0xff]
        %v421 = vld [vmem:[%s1 + $0x20] sm:$0xff]
        %v422 = vld [vmem:[%s1 + $0x28] sm:$0xff]
        %v423 = vld [vmem:[%s1 + $0x30] sm:$0xff]
        %v424 = vld [vmem:[%s1 + $0x38] sm:$0xff]
        %v425 = vld [vmem:[%s1 + $0x40] sm:$0xff]
        %v426 = vld [vmem:[%s1 + $0x48] sm:$0xff]
        %v427 = vld [vmem:[%s1 + $0x50] sm:$0xff]
        %v428 = vld [vmem:[%s1 + $0x58] sm:$0xff]
        %v429 = vld [vmem:[%s1 + $0x60] sm:$0xff]
        %v430 = vld [vmem:[%s1 + $0x68] sm:$0xff]
        %v431 = vld [vmem:[%s1 + $0x70] sm:$0xff]
        %v432 = vld [vmem:[%s1 + $0x78] sm:$0xff]
        %v433 = vld [vmem:[%s2] sm:$0xff]
        %v434 = vld [vmem:[%s2 + $0x8] sm:$0xff]
        %v435 = vld [vmem:[%s2 + $0x10] sm:$0xff]
        %v436 = vld [vmem:[%s2 + $0x18] sm:$0xff]
        %v437 = vld [vmem:[%s2 + $0x20] sm:$0xff]
        %v438 = vld [vmem:[%s2 + $0x28] sm:$0xff]
        %v439 = vld [vmem:[%s2 + $0x30] sm:$0xff]
        %v440 = vld [vmem:[%s2 + $0x38] sm:$0xff]
        %v441 = vld [vmem:[%s2 + $0x40] sm:$0xff]
        %v442 = vld [vmem:[%s2 + $0x48] sm:$0xff]
        %v443 = vld [vmem:[%s2 + $0x50] sm:$0xff]
        %v444 = vld [vmem:[%s2 + $0x58] sm:$0xff]
        %v445 = vld [vmem:[%s2 + $0x60] sm:$0xff]
        %v446 = vld [vmem:[%s2 + $0x68] sm:$0xff]
        %v447 = vld [vmem:[%s2 + $0x70] sm:$0xff]
        %v448 = vld [vmem:[%s2 + $0x78] sm:$0xff]
        %450 = vset.pattern.permute.xlu0 0
        %451 = vperm.xlu0 %450, %v433
        %v452 = vpop.permute.xlu0 %451
        %455 = vset.pattern.permute.xlu0 0
        %456 = vperm.xlu0 %455, %v434
        %v457 = vpop.permute.xlu0 %456
        %460 = vset.pattern.permute.xlu0 0
        %461 = vperm.xlu0 %460, %v435
        %v462 = vpop.permute.xlu0 %461
        %465 = vset.pattern.permute.xlu0 0
        %466 = vperm.xlu0 %465, %v436
        %v467 = vpop.permute.xlu0 %466
        %470 = vset.pattern.permute.xlu0 0
        %471 = vperm.xlu0 %470, %v437
        %v472 = vpop.permute.xlu0 %471
        %475 = vset.pattern.permute.xlu0 0
        %476 = vperm.xlu0 %475, %v438
        %v477 = vpop.permute.xlu0 %476
        %480 = vset.pattern.permute.xlu0 0
        %481 = vperm.xlu0 %480, %v439
        %v482 = vpop.permute.xlu0 %481
        %485 = vset.pattern.permute.xlu0 0
        %486 = vperm.xlu0 %485, %v440
        %v487 = vpop.permute.xlu0 %486
        %490 = vset.pattern.permute.xlu0 0
        %491 = vperm.xlu0 %490, %v441
        %v492 = vpop.permute.xlu0 %491
        %495 = vset.pattern.permute.xlu0 0
        %496 = vperm.xlu0 %495, %v442
        %v497 = vpop.permute.xlu0 %496
        %500 = vset.pattern.permute.xlu0 0
        %501 = vperm.xlu0 %500, %v443
        %v502 = vpop.permute.xlu0 %501
        %505 = vset.pattern.permute.xlu0 0
        %506 = vperm.xlu0 %505, %v444
        %v507 = vpop.permute.xlu0 %506
        %510 = vset.pattern.permute.xlu0 0
        %511 = vperm.xlu0 %510, %v445
        %v512 = vpop.permute.xlu0 %511
        %515 = vset.pattern.permute.xlu0 0
        %516 = vperm.xlu0 %515, %v446
        %v517 = vpop.permute.xlu0 %516
        %520 = vset.pattern.permute.xlu0 0
        %521 = vperm.xlu0 %520, %v447
        %v522 = vpop.permute.xlu0 %521
        %525 = vset.pattern.permute.xlu0 0
        %526 = vperm.xlu0 %525, %v448
        %v527 = vpop.permute.xlu0 %526
        %vm529 = vcmask 130048
        %v531 = vsel %vm529, %v417, 0
        %v534 = vsel %vm529, %v418, 0
        %v537 = vsel %vm529, %v419, 0
        %v540 = vsel %vm529, %v420, 0
        %v543 = vsel %vm529, %v421, 0
        %v546 = vsel %vm529, %v422, 0
        %v549 = vsel %vm529, %v423, 0
        %v552 = vsel %vm529, %v424, 0
        %v555 = vsel %vm529, %v425, 0
        %v558 = vsel %vm529, %v426, 0
        %v561 = vsel %vm529, %v427, 0
        %v564 = vsel %vm529, %v428, 0
        %v567 = vsel %vm529, %v429, 0
        %v570 = vsel %vm529, %v430, 0
        %v573 = vsel %vm529, %v431, 0
        %v576 = vsel %vm529, %v432, 0
        %578 = vmatprep.subr.mxu0 %v410
        %579 = vmatpush1.msra.mxu0 %v409
        %580 = vmatprep.subr.mxu0 %v414
        %581 = vmatpush1.msra.mxu0 %v413
        %582 = vmatprep.subr.mxu0 0.0
        %583 = vmatpush1.msra.mxu0 0.0
        %584 = vmatprep.subr.mxu0 0.0
        %585 = vmatpush1.msra.mxu0 0.0
        %586 = vmatprep.subr.mxu0 0.0
        %587 = vmatpush1.msra.mxu0 0.0
        %588 = vmatprep.subr.mxu0 0.0
        %589 = vmatpush1.msra.mxu0 0.0
        %590 = vmatprep.subr.mxu0 0.0
        %591 = vmatpush1.msra.mxu0 0.0
        %592 = vmatprep.subr.mxu0 0.0
        %593 = vmatpush1.msra.mxu0 0.0
        %594 = vmatprep.subr.mxu0 0.0
        %595 = vmatpush1.msra.mxu0 0.0
        %596 = vmatprep.subr.mxu0 0.0
        %597 = vmatpush1.msra.mxu0 0.0
        %598 = vmatprep.subr.mxu0 0.0
        %599 = vmatpush1.msra.mxu0 0.0
        %600 = vmatprep.subr.mxu0 0.0
        %601 = vmatpush1.msra.mxu0 0.0
        %602 = vmatprep.subr.mxu0 0.0
        %603 = vmatpush1.msra.mxu0 0.0
        %604 = vmatprep.subr.mxu0 0.0
        %605 = vmatpush1.msra.mxu0 0.0
        %606 = vmatprep.subr.mxu0 0.0
        %607 = vmatpush1.msra.mxu0 0.0
        %608 = vmatprep.subr.mxu0 0.0
        %609 = vmatpush1.msra.mxu0 0.0
        %610 = vmatprep.subr.mxu0 0.0
        %611 = vmatpush1.msra.mxu0 0.0
        %612 = vmatprep.subr.mxu0 0.0
        %613 = vmatpush1.msra.mxu0 0.0
        %614 = vmatprep.subr.mxu0 0.0
        %615 = vmatpush1.msra.mxu0 0.0
        %616 = vmatprep.subr.mxu0 0.0
        %617 = vmatpush1.msra.mxu0 0.0
        %618 = vmatprep.subr.mxu0 0.0
        %619 = vmatpush1.msra.mxu0 0.0
        %620 = vmatprep.subr.mxu0 0.0
        %621 = vmatpush1.msra.mxu0 0.0
        %622 = vmatprep.subr.mxu0 0.0
        %623 = vmatpush1.msra.mxu0 0.0
        %624 = vmatprep.subr.mxu0 0.0
        %625 = vmatpush1.msra.mxu0 0.0
        %626 = vmatprep.subr.mxu0 0.0
        %627 = vmatpush1.msra.mxu0 0.0
        %628 = vmatprep.subr.mxu0 0.0
        %629 = vmatpush1.msra.mxu0 0.0
        %630 = vmatprep.subr.mxu0 0.0
        %631 = vmatpush1.msra.mxu0 0.0
        %632 = vmatprep.subr.mxu0 0.0
        %633 = vmatpush1.msra.mxu0 0.0
        %634 = vmatprep.subr.mxu0 0.0
        %635 = vmatpush1.msra.mxu0 0.0
        %636 = vmatprep.subr.mxu0 0.0
        %637 = vmatpush1.msra.mxu0 0.0
        %638 = vmatprep.subr.mxu0 0.0
        %639 = vmatpush1.msra.mxu0 0.0
        %640 = vmatprep.subr.mxu0 0.0
        %641 = vmatpush1.msra.mxu0 0.0
        %642 = vmatprep.mubr.f32.mxu0 0.0
        %643 = vmatmul.mubr.f32.gmra.mrb[0].mxu0 %v531
        %v644 = vpop.f32.mrb[0].mxu0
        %v645 = vadd.f32 %v452, %v644
        %v646 = vpop.f32.mrb[0].mxu0
        %v647 = vadd.f32 %v452, %v646
        %648 = vmatprep.mubr.f32.mxu0 0.0
        %649 = vmatmul.mubr.f32.gmra.mrb[0].mxu0 %v534
        %v650 = vpop.f32.mrb[0].mxu0
        %v651 = vadd.f32 %v457, %v650
        %v652 = vpop.f32.mrb[0].mxu0
        %v653 = vadd.f32 %v457, %v652
        %654 = vmatprep.mubr.f32.mxu0 0.0
        %655 = vmatmul.mubr.f32.gmra.mrb[0].mxu0 %v537
        %v656 = vpop.f32.mrb[0].mxu0
        %v657 = vadd.f32 %v462, %v656
        %v658 = vpop.f32.mrb[0].mxu0
        %v659 = vadd.f32 %v462, %v658
        %660 = vmatprep.mubr.f32.mxu0 0.0
        %661 = vmatmul.mubr.f32.gmra.mrb[0].mxu0 %v540
        %v662 = vpop.f32.mrb[0].mxu0
        %v663 = vadd.f32 %v467, %v662
        %v664 = vpop.f32.mrb[0].mxu0
        %v665 = vadd.f32 %v467, %v664
        %666 = vmatprep.mubr.f32.mxu0 0.0
        %667 = vmatmul.mubr.f32.gmra.mrb[0].mxu0 %v543
        %v668 = vpop.f32.mrb[0].mxu0
        %v669 = vadd.f32 %v472, %v668
        %v670 = vpop.f32.mrb[0].mxu0
        %v671 = vadd.f32 %v472, %v670
        %672 = vmatprep.mubr.f32.mxu0 0.0
        %673 = vmatmul.mubr.f32.gmra.mrb[0].mxu0 %v546
        %v674 = vpop.f32.mrb[0].mxu0
        %v675 = vadd.f32 %v477, %v674
        %v676 = vpop.f32.mrb[0].mxu0
        %v677 = vadd.f32 %v477, %v676
        %678 = vmatprep.mubr.f32.mxu0 0.0
        %679 = vmatmul.mubr.f32.gmra.mrb[0].mxu0 %v549
        %v680 = vpop.f32.mrb[0].mxu0
        %v681 = vadd.f32 %v482, %v680
        %v682 = vpop.f32.mrb[0].mxu0
        %v683 = vadd.f32 %v482, %v682
        %684 = vmatprep.mubr.f32.mxu0 0.0
        %685 = vmatmul.mubr.f32.gmra.mrb[0].mxu0 %v552
        %v686 = vpop.f32.mrb[0].mxu0
        %v687 = vadd.f32 %v487, %v686
        %v688 = vpop.f32.mrb[0].mxu0
        %v689 = vadd.f32 %v487, %v688
        %690 = vmatprep.mubr.f32.mxu0 0.0
        %691 = vmatmul.mubr.f32.gmra.mrb[0].mxu0 %v555
        %v692 = vpop.f32.mrb[0].mxu0
        %v693 = vadd.f32 %v492, %v692
        %v694 = vpop.f32.mrb[0].mxu0
        %v695 = vadd.f32 %v492, %v694
        %696 = vmatprep.mubr.f32.mxu0 0.0
        %697 = vmatmul.mubr.f32.gmra.mrb[0].mxu0 %v558
        %v698 = vpop.f32.mrb[0].mxu0
        %v699 = vadd.f32 %v497, %v698
        %v700 = vpop.f32.mrb[0].mxu0
        %v701 = vadd.f32 %v497, %v700
        %702 = vmatprep.mubr.f32.mxu0 0.0
        %703 = vmatmul.mubr.f32.gmra.mrb[0].mxu0 %v561
        %v704 = vpop.f32.mrb[0].mxu0
        %v705 = vadd.f32 %v502, %v704
        %v706 = vpop.f32.mrb[0].mxu0
        %v707 = vadd.f32 %v502, %v706
        %708 = vmatprep.mubr.f32.mxu0 0.0
        %709 = vmatmul.mubr.f32.gmra.mrb[0].mxu0 %v564
        %v710 = vpop.f32.mrb[0].mxu0
        %v711 = vadd.f32 %v507, %v710
        %v712 = vpop.f32.mrb[0].mxu0
        %v713 = vadd.f32 %v507, %v712
        %714 = vmatprep.mubr.f32.mxu0 0.0
        %715 = vmatmul.mubr.f32.gmra.mrb[0].mxu0 %v567
        %v716 = vpop.f32.mrb[0].mxu0
        %v717 = vadd.f32 %v512, %v716
        %v718 = vpop.f32.mrb[0].mxu0
        %v719 = vadd.f32 %v512, %v718
        %720 = vmatprep.mubr.f32.mxu0 0.0
        %721 = vmatmul.mubr.f32.gmra.mrb[0].mxu0 %v570
        %v722 = vpop.f32.mrb[0].mxu0
        %v723 = vadd.f32 %v517, %v722
        %v724 = vpop.f32.mrb[0].mxu0
        %v725 = vadd.f32 %v517, %v724
        %726 = vmatprep.mubr.f32.mxu0 0.0
        %727 = vmatmul.mubr.f32.gmra.mrb[0].mxu0 %v573
        %v728 = vpop.f32.mrb[0].mxu0
        %v729 = vadd.f32 %v522, %v728
        %v730 = vpop.f32.mrb[0].mxu0
        %v731 = vadd.f32 %v522, %v730
        %732 = vmatprep.mubr.f32.mxu0 0.0
        %733 = vmatmul.mubr.f32.gmra.mrb[0].mxu0 %v576
        %v734 = vpop.f32.mrb[0].mxu0
        %v735 = vadd.f32 %v527, %v734
        %v736 = vpop.f32.mrb[0].mxu0
        %v737 = vadd.f32 %v527, %v736
        %738 = vdwg.mxu0
        %739 = vmatprep.subr.mxu0 %v412
        %740 = vmatpush1.msra.mxu0 %v411
        %741 = vmatprep.subr.mxu0 %v416
        %742 = vmatpush1.msra.mxu0 %v415
        %743 = vmatprep.subr.mxu0 0.0
        %744 = vmatpush1.msra.mxu0 0.0
        %745 = vmatprep.subr.mxu0 0.0
        %746 = vmatpush1.msra.mxu0 0.0
        %747 = vmatprep.subr.mxu0 0.0
        %748 = vmatpush1.msra.mxu0 0.0
        %749 = vmatprep.subr.mxu0 0.0
        %750 = vmatpush1.msra.mxu0 0.0
        %751 = vmatprep.subr.mxu0 0.0
        %752 = vmatpush1.msra.mxu0 0.0
        %753 = vmatprep.subr.mxu0 0.0
        %754 = vmatpush1.msra.mxu0 0.0
        %755 = vmatprep.subr.mxu0 0.0
        %756 = vmatpush1.msra.mxu0 0.0
        %757 = vmatprep.subr.mxu0 0.0
        %758 = vmatpush1.msra.mxu0 0.0
        %759 = vmatprep.subr.mxu0 0.0
        %760 = vmatpush1.msra.mxu0 0.0
        %761 = vmatprep.subr.mxu0 0.0
        %762 = vmatpush1.msra.mxu0 0.0
        %763 = vmatprep.subr.mxu0 0.0
        %764 = vmatpush1.msra.mxu0 0.0
        %765 = vmatprep.subr.mxu0 0.0
        %766 = vmatpush1.msra.mxu0 0.0
        %767 = vmatprep.subr.mxu0 0.0
        %768 = vmatpush1.msra.mxu0 0.0
        %769 = vmatprep.subr.mxu0 0.0
        %770 = vmatpush1.msra.mxu0 0.0
        %771 = vmatprep.subr.mxu0 0.0
        %772 = vmatpush1.msra.mxu0 0.0
        %773 = vmatprep.subr.mxu0 0.0
        %774 = vmatpush1.msra.mxu0 0.0
        %775 = vmatprep.subr.mxu0 0.0
        %776 = vmatpush1.msra.mxu0 0.0
        %777 = vmatprep.subr.mxu0 0.0
        %778 = vmatpush1.msra.mxu0 0.0
        %779 = vmatprep.subr.mxu0 0.0
        %780 = vmatpush1.msra.mxu0 0.0
        %781 = vmatprep.subr.mxu0 0.0
        %782 = vmatpush1.msra.mxu0 0.0
        %783 = vmatprep.subr.mxu0 0.0
        %784 = vmatpush1.msra.mxu0 0.0
        %785 = vmatprep.subr.mxu0 0.0
        %786 = vmatpush1.msra.mxu0 0.0
        %787 = vmatprep.subr.mxu0 0.0
        %788 = vmatpush1.msra.mxu0 0.0
        %789 = vmatprep.subr.mxu0 0.0
        %790 = vmatpush1.msra.mxu0 0.0
        %791 = vmatprep.subr.mxu0 0.0
        %792 = vmatpush1.msra.mxu0 0.0
        %793 = vmatprep.subr.mxu0 0.0
        %794 = vmatpush1.msra.mxu0 0.0
        %795 = vmatprep.subr.mxu0 0.0
        %796 = vmatpush1.msra.mxu0 0.0
        %797 = vmatprep.subr.mxu0 0.0
        %798 = vmatpush1.msra.mxu0 0.0
        %799 = vmatprep.subr.mxu0 0.0
        %800 = vmatpush1.msra.mxu0 0.0
        %801 = vmatprep.subr.mxu0 0.0
        %802 = vmatpush1.msra.mxu0 0.0
        %803 = vmatprep.mubr.f32.mxu0 0.0
        %804 = vmatmul.mubr.f32.gmra.mrb[0].mxu0 %v531
        %v805 = vpop.f32.mrb[0].mxu0
        %v806 = vadd.f32 %v452, %v805
        %v807 = vpop.f32.mrb[0].mxu0
        %v808 = vadd.f32 %v452, %v807
        %809 = vmatprep.mubr.f32.mxu0 0.0
        %810 = vmatmul.mubr.f32.gmra.mrb[0].mxu0 %v534
        %v811 = vpop.f32.mrb[0].mxu0
        %v812 = vadd.f32 %v457, %v811
        %v813 = vpop.f32.mrb[0].mxu0
        %v814 = vadd.f32 %v457, %v813
        %815 = vmatprep.mubr.f32.mxu0 0.0
        %816 = vmatmul.mubr.f32.gmra.mrb[0].mxu0 %v537
        %v817 = vpop.f32.mrb[0].mxu0
        %v818 = vadd.f32 %v462, %v817
        %v819 = vpop.f32.mrb[0].mxu0
        %v820 = vadd.f32 %v462, %v819
        %821 = vmatprep.mubr.f32.mxu0 0.0
        %822 = vmatmul.mubr.f32.gmra.mrb[0].mxu0 %v540
        %v823 = vpop.f32.mrb[0].mxu0
        %v824 = vadd.f32 %v467, %v823
        %v825 = vpop.f32.mrb[0].mxu0
        %v826 = vadd.f32 %v467, %v825
        %827 = vmatprep.mubr.f32.mxu0 0.0
        %828 = vmatmul.mubr.f32.gmra.mrb[0].mxu0 %v543
        %v829 = vpop.f32.mrb[0].mxu0
        %v830 = vadd.f32 %v472, %v829
        %v831 = vpop.f32.mrb[0].mxu0
        %v832 = vadd.f32 %v472, %v831
        %833 = vmatprep.mubr.f32.mxu0 0.0
        %834 = vmatmul.mubr.f32.gmra.mrb[0].mxu0 %v546
        %v835 = vpop.f32.mrb[0].mxu0
        %v836 = vadd.f32 %v477, %v835
        %v837 = vpop.f32.mrb[0].mxu0
        %v838 = vadd.f32 %v477, %v837
        %839 = vmatprep.mubr.f32.mxu0 0.0
        %840 = vmatmul.mubr.f32.gmra.mrb[0].mxu0 %v549
        %v841 = vpop.f32.mrb[0].mxu0
        %v842 = vadd.f32 %v482, %v841
        %v843 = vpop.f32.mrb[0].mxu0
        %v844 = vadd.f32 %v482, %v843
        %845 = vmatprep.mubr.f32.mxu0 0.0
        %846 = vmatmul.mubr.f32.gmra.mrb[0].mxu0 %v552
        %v847 = vpop.f32.mrb[0].mxu0
        %v848 = vadd.f32 %v487, %v847
        %v849 = vpop.f32.mrb[0].mxu0
        %v850 = vadd.f32 %v487, %v849
        %851 = vmatprep.mubr.f32.mxu0 0.0
        %852 = vmatmul.mubr.f32.gmra.mrb[0].mxu0 %v555
        %v853 = vpop.f32.mrb[0].mxu0
        %v854 = vadd.f32 %v492, %v853
        %v855 = vpop.f32.mrb[0].mxu0
        %v856 = vadd.f32 %v492, %v855
        %857 = vmatprep.mubr.f32.mxu0 0.0
        %858 = vmatmul.mubr.f32.gmra.mrb[0].mxu0 %v558
        %v859 = vpop.f32.mrb[0].mxu0
        %v860 = vadd.f32 %v497, %v859
        %v861 = vpop.f32.mrb[0].mxu0
        %v862 = vadd.f32 %v497, %v861
        %863 = vmatprep.mubr.f32.mxu0 0.0
        %864 = vmatmul.mubr.f32.gmra.mrb[0].mxu0 %v561
        %v865 = vpop.f32.mrb[0].mxu0
        %v866 = vadd.f32 %v502, %v865
        %v867 = vpop.f32.mrb[0].mxu0
        %v868 = vadd.f32 %v502, %v867
        %869 = vmatprep.mubr.f32.mxu0 0.0
        %870 = vmatmul.mubr.f32.gmra.mrb[0].mxu0 %v564
        %v871 = vpop.f32.mrb[0].mxu0
        %v872 = vadd.f32 %v507, %v871
        %v873 = vpop.f32.mrb[0].mxu0
        %v874 = vadd.f32 %v507, %v873
        %875 = vmatprep.mubr.f32.mxu0 0.0
        %876 = vmatmul.mubr.f32.gmra.mrb[0].mxu0 %v567
        %v877 = vpop.f32.mrb[0].mxu0
        %v878 = vadd.f32 %v512, %v877
        %v879 = vpop.f32.mrb[0].mxu0
        %v880 = vadd.f32 %v512, %v879
        %881 = vmatprep.mubr.f32.mxu0 0.0
        %882 = vmatmul.mubr.f32.gmra.mrb[0].mxu0 %v570
        %v883 = vpop.f32.mrb[0].mxu0
        %v884 = vadd.f32 %v517, %v883
        %v885 = vpop.f32.mrb[0].mxu0
        %v886 = vadd.f32 %v517, %v885
        %887 = vmatprep.mubr.f32.mxu0 0.0
        %888 = vmatmul.mubr.f32.gmra.mrb[0].mxu0 %v573
        %v889 = vpop.f32.mrb[0].mxu0
        %v890 = vadd.f32 %v522, %v889
        %v891 = vpop.f32.mrb[0].mxu0
        %v892 = vadd.f32 %v522, %v891
        %893 = vmatprep.mubr.f32.mxu0 0.0
        %894 = vmatmul.mubr.f32.gmra.mrb[0].mxu0 %v576
        %v895 = vpop.f32.mrb[0].mxu0
        %v896 = vadd.f32 %v527, %v895
        %v897 = vpop.f32.mrb[0].mxu0
        %v898 = vadd.f32 %v527, %v897
        %899 = vdwg.mxu0
        %v900 = vld [vmem:[%s3] sm:$0xff]
        %v901 = vld [vmem:[%s3 + $0x8] sm:$0xff]
        %v902 = vld [vmem:[%s3 + $0x10] sm:$0xff]
        %v903 = vld [vmem:[%s3 + $0x18] sm:$0xff]
        %v904 = vld [vmem:[%s3 + $0x20] sm:$0xff]
        %v905 = vld [vmem:[%s3 + $0x28] sm:$0xff]
        %v906 = vld [vmem:[%s3 + $0x30] sm:$0xff]
        %v907 = vld [vmem:[%s3 + $0x38] sm:$0xff]
        %v908 = vld [vmem:[%s3 + $0x40] sm:$0xff]
        %v909 = vld [vmem:[%s3 + $0x48] sm:$0xff]
        %v910 = vld [vmem:[%s3 + $0x50] sm:$0xff]
        %v911 = vld [vmem:[%s3 + $0x58] sm:$0xff]
        %v912 = vld [vmem:[%s3 + $0x60] sm:$0xff]
        %v913 = vld [vmem:[%s3 + $0x68] sm:$0xff]
        %v914 = vld [vmem:[%s3 + $0x70] sm:$0xff]
        %v915 = vld [vmem:[%s3 + $0x78] sm:$0xff]
        %v916 = vld [vmem:[%s4] sm:$0xff]
        %v917 = vld [vmem:[%s4 + $0x8] sm:$0xff]
        %v918 = vld [vmem:[%s4 + $0x10] sm:$0xff]
        %v919 = vld [vmem:[%s4 + $0x18] sm:$0xff]
        %v920 = vld [vmem:[%s4 + $0x20] sm:$0xff]
        %v921 = vld [vmem:[%s4 + $0x28] sm:$0xff]
        %v922 = vld [vmem:[%s4 + $0x30] sm:$0xff]
        %v923 = vld [vmem:[%s4 + $0x38] sm:$0xff]
        %v924 = vld [vmem:[%s4 + $0x40] sm:$0xff]
        %v925 = vld [vmem:[%s4 + $0x48] sm:$0xff]
        %v926 = vld [vmem:[%s4 + $0x50] sm:$0xff]
        %v927 = vld [vmem:[%s4 + $0x58] sm:$0xff]
        %v928 = vld [vmem:[%s4 + $0x60] sm:$0xff]
        %v929 = vld [vmem:[%s4 + $0x68] sm:$0xff]
        %v930 = vld [vmem:[%s4 + $0x70] sm:$0xff]
        %v931 = vld [vmem:[%s4 + $0x78] sm:$0xff]
        %933 = vset.pattern.permute.xlu0 0
        %934 = vperm.xlu0 %933, %v916
        %v935 = vpop.permute.xlu0 %934
        %938 = vset.pattern.permute.xlu0 0
        %939 = vperm.xlu0 %938, %v917
        %v940 = vpop.permute.xlu0 %939
        %943 = vset.pattern.permute.xlu0 0
        %944 = vperm.xlu0 %943, %v918
        %v945 = vpop.permute.xlu0 %944
        %948 = vset.pattern.permute.xlu0 0
        %949 = vperm.xlu0 %948, %v919
        %v950 = vpop.permute.xlu0 %949
        %953 = vset.pattern.permute.xlu0 0
        %954 = vperm.xlu0 %953, %v920
        %v955 = vpop.permute.xlu0 %954
        %958 = vset.pattern.permute.xlu0 0
        %959 = vperm.xlu0 %958, %v921
        %v960 = vpop.permute.xlu0 %959
        %963 = vset.pattern.permute.xlu0 0
        %964 = vperm.xlu0 %963, %v922
        %v965 = vpop.permute.xlu0 %964
        %968 = vset.pattern.permute.xlu0 0
        %969 = vperm.xlu0 %968, %v923
        %v970 = vpop.permute.xlu0 %969
        %973 = vset.pattern.permute.xlu0 0
        %974 = vperm.xlu0 %973, %v924
        %v975 = vpop.permute.xlu0 %974
        %978 = vset.pattern.permute.xlu0 0
        %979 = vperm.xlu0 %978, %v925
        %v980 = vpop.permute.xlu0 %979
        %983 = vset.pattern.permute.xlu0 0
        %984 = vperm.xlu0 %983, %v926
        %v985 = vpop.permute.xlu0 %984
        %988 = vset.pattern.permute.xlu0 0
        %989 = vperm.xlu0 %988, %v927
        %v990 = vpop.permute.xlu0 %989
        %993 = vset.pattern.permute.xlu0 0
        %994 = vperm.xlu0 %993, %v928
        %v995 = vpop.permute.xlu0 %994
        %998 = vset.pattern.permute.xlu0 0
        %999 = vperm.xlu0 %998, %v929
        %v1000 = vpop.permute.xlu0 %999
        %1003 = vset.pattern.permute.xlu0 0
        %1004 = vperm.xlu0 %1003, %v930
        %v1005 = vpop.permute.xlu0 %1004
        %1008 = vset.pattern.permute.xlu0 0
        %1009 = vperm.xlu0 %1008, %v931
        %v1010 = vpop.permute.xlu0 %1009
        %v1013 = vsel %vm529, %v900, 0
        %v1016 = vsel %vm529, %v901, 0
        %v1019 = vsel %vm529, %v902, 0
        %v1022 = vsel %vm529, %v903, 0
        %v1025 = vsel %vm529, %v904, 0
        %v1028 = vsel %vm529, %v905, 0
        %v1031 = vsel %vm529, %v906, 0
        %v1034 = vsel %vm529, %v907, 0
        %v1037 = vsel %vm529, %v908, 0
        %v1040 = vsel %vm529, %v909, 0
        %v1043 = vsel %vm529, %v910, 0
        %v1046 = vsel %vm529, %v911, 0
        %v1049 = vsel %vm529, %v912, 0
        %v1052 = vsel %vm529, %v913, 0
        %v1055 = vsel %vm529, %v914, 0
        %v1058 = vsel %vm529, %v915, 0
        %1060 = vmatprep.subr.mxu0 %v410
        %1061 = vmatpush1.msra.mxu0 %v409
        %1062 = vmatprep.subr.mxu0 %v414
        %1063 = vmatpush1.msra.mxu0 %v413
        %1064 = vmatprep.subr.mxu0 0.0
        %1065 = vmatpush1.msra.mxu0 0.0
        %1066 = vmatprep.subr.mxu0 0.0
        %1067 = vmatpush1.msra.mxu0 0.0
        %1068 = vmatprep.subr.mxu0 0.0
        %1069 = vmatpush1.msra.mxu0 0.0
        %1070 = vmatprep.subr.mxu0 0.0
        %1071 = vmatpush1.msra.mxu0 0.0
        %1072 = vmatprep.subr.mxu0 0.0
        %1073 = vmatpush1.msra.mxu0 0.0
        %1074 = vmatprep.subr.mxu0 0.0
        %1075 = vmatpush1.msra.mxu0 0.0
        %1076 = vmatprep.subr.mxu0 0.0
        %1077 = vmatpush1.msra.mxu0 0.0
        %1078 = vmatprep.subr.mxu0 0.0
        %1079 = vmatpush1.msra.mxu0 0.0
        %1080 = vmatprep.subr.mxu0 0.0
        %1081 = vmatpush1.msra.mxu0 0.0
        %1082 = vmatprep.subr.mxu0 0.0
        %1083 = vmatpush1.msra.mxu0 0.0
        %1084 = vmatprep.subr.mxu0 0.0
        %1085 = vmatpush1.msra.mxu0 0.0
        %1086 = vmatprep.subr.mxu0 0.0
        %1087 = vmatpush1.msra.mxu0 0.0
        %1088 = vmatprep.subr.mxu0 0.0
        %1089 = vmatpush1.msra.mxu0 0.0
        %1090 = vmatprep.subr.mxu0 0.0
        %1091 = vmatpush1.msra.mxu0 0.0
        %1092 = vmatprep.subr.mxu0 0.0
        %1093 = vmatpush1.msra.mxu0 0.0
        %1094 = vmatprep.subr.mxu0 0.0
        %1095 = vmatpush1.msra.mxu0 0.0
        %1096 = vmatprep.subr.mxu0 0.0
        %1097 = vmatpush1.msra.mxu0 0.0
        %1098 = vmatprep.subr.mxu0 0.0
        %1099 = vmatpush1.msra.mxu0 0.0
        %1100 = vmatprep.subr.mxu0 0.0
        %1101 = vmatpush1.msra.mxu0 0.0
        %1102 = vmatprep.subr.mxu0 0.0
        %1103 = vmatpush1.msra.mxu0 0.0
        %1104 = vmatprep.subr.mxu0 0.0
        %1105 = vmatpush1.msra.mxu0 0.0
        %1106 = vmatprep.subr.mxu0 0.0
        %1107 = vmatpush1.msra.mxu0 0.0
        %1108 = vmatprep.subr.mxu0 0.0
        %1109 = vmatpush1.msra.mxu0 0.0
        %1110 = vmatprep.subr.mxu0 0.0
        %1111 = vmatpush1.msra.mxu0 0.0
        %1112 = vmatprep.subr.mxu0 0.0
        %1113 = vmatpush1.msra.mxu0 0.0
        %1114 = vmatprep.subr.mxu0 0.0
        %1115 = vmatpush1.msra.mxu0 0.0
        %1116 = vmatprep.subr.mxu0 0.0
        %1117 = vmatpush1.msra.mxu0 0.0
        %1118 = vmatprep.subr.mxu0 0.0
        %1119 = vmatpush1.msra.mxu0 0.0
        %1120 = vmatprep.subr.mxu0 0.0
        %1121 = vmatpush1.msra.mxu0 0.0
        %1122 = vmatprep.subr.mxu0 0.0
        %1123 = vmatpush1.msra.mxu0 0.0
        %1124 = vmatprep.mubr.f32.mxu0 0.0
        %1125 = vmatmul.mubr.f32.gmra.mrb[0].mxu0 %v1013
        %v1126 = vpop.f32.mrb[0].mxu0
        %v1127 = vadd.f32 %v935, %v1126
        %v1128 = vpop.f32.mrb[0].mxu0
        %v1129 = vadd.f32 %v935, %v1128
        %1130 = vmatprep.mubr.f32.mxu0 0.0
        %1131 = vmatmul.mubr.f32.gmra.mrb[0].mxu0 %v1016
        %v1132 = vpop.f32.mrb[0].mxu0
        %v1133 = vadd.f32 %v940, %v1132
        %v1134 = vpop.f32.mrb[0].mxu0
        %v1135 = vadd.f32 %v940, %v1134
        %1136 = vmatprep.mubr.f32.mxu0 0.0
        %1137 = vmatmul.mubr.f32.gmra.mrb[0].mxu0 %v1019
        %v1138 = vpop.f32.mrb[0].mxu0
        %v1139 = vadd.f32 %v945, %v1138
        %v1140 = vpop.f32.mrb[0].mxu0
        %v1141 = vadd.f32 %v945, %v1140
        %1142 = vmatprep.mubr.f32.mxu0 0.0
        %1143 = vmatmul.mubr.f32.gmra.mrb[0].mxu0 %v1022
        %v1144 = vpop.f32.mrb[0].mxu0
        %v1145 = vadd.f32 %v950, %v1144
        %v1146 = vpop.f32.mrb[0].mxu0
        %v1147 = vadd.f32 %v950, %v1146
        %1148 = vmatprep.mubr.f32.mxu0 0.0
        %1149 = vmatmul.mubr.f32.gmra.mrb[0].mxu0 %v1025
        %v1150 = vpop.f32.mrb[0].mxu0
        %v1151 = vadd.f32 %v955, %v1150
        %v1152 = vpop.f32.mrb[0].mxu0
        %v1153 = vadd.f32 %v955, %v1152
        %1154 = vmatprep.mubr.f32.mxu0 0.0
        %1155 = vmatmul.mubr.f32.gmra.mrb[0].mxu0 %v1028
        %v1156 = vpop.f32.mrb[0].mxu0
        %v1157 = vadd.f32 %v960, %v1156
        %v1158 = vpop.f32.mrb[0].mxu0
        %v1159 = vadd.f32 %v960, %v1158
        %1160 = vmatprep.mubr.f32.mxu0 0.0
        %1161 = vmatmul.mubr.f32.gmra.mrb[0].mxu0 %v1031
        %v1162 = vpop.f32.mrb[0].mxu0
        %v1163 = vadd.f32 %v965, %v1162
        %v1164 = vpop.f32.mrb[0].mxu0
        %v1165 = vadd.f32 %v965, %v1164
        %1166 = vmatprep.mubr.f32.mxu0 0.0
        %1167 = vmatmul.mubr.f32.gmra.mrb[0].mxu0 %v1034
        %v1168 = vpop.f32.mrb[0].mxu0
        %v1169 = vadd.f32 %v970, %v1168
        %v1170 = vpop.f32.mrb[0].mxu0
        %v1171 = vadd.f32 %v970, %v1170
        %1172 = vmatprep.mubr.f32.mxu0 0.0
        %1173 = vmatmul.mubr.f32.gmra.mrb[0].mxu0 %v1037
        %v1174 = vpop.f32.mrb[0].mxu0
        %v1175 = vadd.f32 %v975, %v1174
        %v1176 = vpop.f32.mrb[0].mxu0
        %v1177 = vadd.f32 %v975, %v1176
        %1178 = vmatprep.mubr.f32.mxu0 0.0
        %1179 = vmatmul.mubr.f32.gmra.mrb[0].mxu0 %v1040
        %v1180 = vpop.f32.mrb[0].mxu0
        %v1181 = vadd.f32 %v980, %v1180
        %v1182 = vpop.f32.mrb[0].mxu0
        %v1183 = vadd.f32 %v980, %v1182
        %1184 = vmatprep.mubr.f32.mxu0 0.0
        %1185 = vmatmul.mubr.f32.gmra.mrb[0].mxu0 %v1043
        %v1186 = vpop.f32.mrb[0].mxu0
        %v1187 = vadd.f32 %v985, %v1186
        %v1188 = vpop.f32.mrb[0].mxu0
        %v1189 = vadd.f32 %v985, %v1188
        %1190 = vmatprep.mubr.f32.mxu0 0.0
        %1191 = vmatmul.mubr.f32.gmra.mrb[0].mxu0 %v1046
        %v1192 = vpop.f32.mrb[0].mxu0
        %v1193 = vadd.f32 %v990, %v1192
        %v1194 = vpop.f32.mrb[0].mxu0
        %v1195 = vadd.f32 %v990, %v1194
        %1196 = vmatprep.mubr.f32.mxu0 0.0
        %1197 = vmatmul.mubr.f32.gmra.mrb[0].mxu0 %v1049
        %v1198 = vpop.f32.mrb[0].mxu0
        %v1199 = vadd.f32 %v995, %v1198
        %v1200 = vpop.f32.mrb[0].mxu0
        %v1201 = vadd.f32 %v995, %v1200
        %1202 = vmatprep.mubr.f32.mxu0 0.0
        %1203 = vmatmul.mubr.f32.gmra.mrb[0].mxu0 %v1052
        %v1204 = vpop.f32.mrb[0].mxu0
        %v1205 = vadd.f32 %v1000, %v1204
        %v1206 = vpop.f32.mrb[0].mxu0
        %v1207 = vadd.f32 %v1000, %v1206
        %1208 = vmatprep.mubr.f32.mxu0 0.0
        %1209 = vmatmul.mubr.f32.gmra.mrb[0].mxu0 %v1055
        %v1210 = vpop.f32.mrb[0].mxu0
        %v1211 = vadd.f32 %v1005, %v1210
        %v1212 = vpop.f32.mrb[0].mxu0
        %v1213 = vadd.f32 %v1005, %v1212
        %1214 = vmatprep.mubr.f32.mxu0 0.0
        %1215 = vmatmul.mubr.f32.gmra.mrb[0].mxu0 %v1058
        %v1216 = vpop.f32.mrb[0].mxu0
        %v1217 = vadd.f32 %v1010, %v1216
        %v1218 = vpop.f32.mrb[0].mxu0
        %v1219 = vadd.f32 %v1010, %v1218
        %1220 = vdwg.mxu0
        %1221 = vmatprep.subr.mxu0 %v412
        %1222 = vmatpush1.msra.mxu0 %v411
        %1223 = vmatprep.subr.mxu0 %v416
        %1224 = vmatpush1.msra.mxu0 %v415
        %1225 = vmatprep.subr.mxu0 0.0
        %1226 = vmatpush1.msra.mxu0 0.0
        %1227 = vmatprep.subr.mxu0 0.0
        %1228 = vmatpush1.msra.mxu0 0.0
        %1229 = vmatprep.subr.mxu0 0.0
        %1230 = vmatpush1.msra.mxu0 0.0
        %1231 = vmatprep.subr.mxu0 0.0
        %1232 = vmatpush1.msra.mxu0 0.0
        %1233 = vmatprep.subr.mxu0 0.0
        %1234 = vmatpush1.msra.mxu0 0.0
        %1235 = vmatprep.subr.mxu0 0.0
        %1236 = vmatpush1.msra.mxu0 0.0
        %1237 = vmatprep.subr.mxu0 0.0
        %1238 = vmatpush1.msra.mxu0 0.0
        %1239 = vmatprep.subr.mxu0 0.0
        %1240 = vmatpush1.msra.mxu0 0.0
        %1241 = vmatprep.subr.mxu0 0.0
        %1242 = vmatpush1.msra.mxu0 0.0
        %1243 = vmatprep.subr.mxu0 0.0
        %1244 = vmatpush1.msra.mxu0 0.0
        %1245 = vmatprep.subr.mxu0 0.0
        %1246 = vmatpush1.msra.mxu0 0.0
        %1247 = vmatprep.subr.mxu0 0.0
        %1248 = vmatpush1.msra.mxu0 0.0
        %1249 = vmatprep.subr.mxu0 0.0
        %1250 = vmatpush1.msra.mxu0 0.0
        %1251 = vmatprep.subr.mxu0 0.0
        %1252 = vmatpush1.msra.mxu0 0.0
        %1253 = vmatprep.subr.mxu0 0.0
        %1254 = vmatpush1.msra.mxu0 0.0
        %1255 = vmatprep.subr.mxu0 0.0
        %1256 = vmatpush1.msra.mxu0 0.0
        %1257 = vmatprep.subr.mxu0 0.0
        %1258 = vmatpush1.msra.mxu0 0.0
        %1259 = vmatprep.subr.mxu0 0.0
        %1260 = vmatpush1.msra.mxu0 0.0
        %1261 = vmatprep.subr.mxu0 0.0
        %1262 = vmatpush1.msra.mxu0 0.0
        %1263 = vmatprep.subr.mxu0 0.0
        %1264 = vmatpush1.msra.mxu0 0.0
        %1265 = vmatprep.subr.mxu0 0.0
        %1266 = vmatpush1.msra.mxu0 0.0
        %1267 = vmatprep.subr.mxu0 0.0
        %1268 = vmatpush1.msra.mxu0 0.0
        %1269 = vmatprep.subr.mxu0 0.0
        %1270 = vmatpush1.msra.mxu0 0.0
        %1271 = vmatprep.subr.mxu0 0.0
        %1272 = vmatpush1.msra.mxu0 0.0
        %1273 = vmatprep.subr.mxu0 0.0
        %1274 = vmatpush1.msra.mxu0 0.0
        %1275 = vmatprep.subr.mxu0 0.0
        %1276 = vmatpush1.msra.mxu0 0.0
        %1277 = vmatprep.subr.mxu0 0.0
        %1278 = vmatpush1.msra.mxu0 0.0
        %1279 = vmatprep.subr.mxu0 0.0
        %1280 = vmatpush1.msra.mxu0 0.0
        %1281 = vmatprep.subr.mxu0 0.0
        %1282 = vmatpush1.msra.mxu0 0.0
        %1283 = vmatprep.subr.mxu0 0.0
        %1284 = vmatpush1.msra.mxu0 0.0
        %1285 = vmatprep.mubr.f32.mxu0 0.0
        %1286 = vmatmul.mubr.f32.gmra.mrb[0].mxu0 %v1013
        %v1287 = vpop.f32.mrb[0].mxu0
        %v1288 = vadd.f32 %v935, %v1287
        %v1289 = vpop.f32.mrb[0].mxu0
        %v1290 = vadd.f32 %v935, %v1289
        %1291 = vmatprep.mubr.f32.mxu0 0.0
        %1292 = vmatmul.mubr.f32.gmra.mrb[0].mxu0 %v1016
        %v1293 = vpop.f32.mrb[0].mxu0
        %v1294 = vadd.f32 %v940, %v1293
        %v1295 = vpop.f32.mrb[0].mxu0
        %v1296 = vadd.f32 %v940, %v1295
        %1297 = vmatprep.mubr.f32.mxu0 0.0
        %1298 = vmatmul.mubr.f32.gmra.mrb[0].mxu0 %v1019
        %v1299 = vpop.f32.mrb[0].mxu0
        %v1300 = vadd.f32 %v945, %v1299
        %v1301 = vpop.f32.mrb[0].mxu0
        %v1302 = vadd.f32 %v945, %v1301
        %1303 = vmatprep.mubr.f32.mxu0 0.0
        %1304 = vmatmul.mubr.f32.gmra.mrb[0].mxu0 %v1022
        %v1305 = vpop.f32.mrb[0].mxu0
        %v1306 = vadd.f32 %v950, %v1305
        %v1307 = vpop.f32.mrb[0].mxu0
        %v1308 = vadd.f32 %v950, %v1307
        %1309 = vmatprep.mubr.f32.mxu0 0.0
        %1310 = vmatmul.mubr.f32.gmra.mrb[0].mxu0 %v1025
        %v1311 = vpop.f32.mrb[0].mxu0
        %v1312 = vadd.f32 %v955, %v1311
        %v1313 = vpop.f32.mrb[0].mxu0
        %v1314 = vadd.f32 %v955, %v1313
        %1315 = vmatprep.mubr.f32.mxu0 0.0
        %1316 = vmatmul.mubr.f32.gmra.mrb[0].mxu0 %v1028
        %v1317 = vpop.f32.mrb[0].mxu0
        %v1318 = vadd.f32 %v960, %v1317
        %v1319 = vpop.f32.mrb[0].mxu0
        %v1320 = vadd.f32 %v960, %v1319
        %1321 = vmatprep.mubr.f32.mxu0 0.0
        %1322 = vmatmul.mubr.f32.gmra.mrb[0].mxu0 %v1031
        %v1323 = vpop.f32.mrb[0].mxu0
        %v1324 = vadd.f32 %v965, %v1323
        %v1325 = vpop.f32.mrb[0].mxu0
        %v1326 = vadd.f32 %v965, %v1325
        %1327 = vmatprep.mubr.f32.mxu0 0.0
        %1328 = vmatmul.mubr.f32.gmra.mrb[0].mxu0 %v1034
        %v1329 = vpop.f32.mrb[0].mxu0
        %v1330 = vadd.f32 %v970, %v1329
        %v1331 = vpop.f32.mrb[0].mxu0
        %v1332 = vadd.f32 %v970, %v1331
        %1333 = vmatprep.mubr.f32.mxu0 0.0
        %1334 = vmatmul.mubr.f32.gmra.mrb[0].mxu0 %v1037
        %v1335 = vpop.f32.mrb[0].mxu0
        %v1336 = vadd.f32 %v975, %v1335
        %v1337 = vpop.f32.mrb[0].mxu0
        %v1338 = vadd.f32 %v975, %v1337
        %1339 = vmatprep.mubr.f32.mxu0 0.0
        %1340 = vmatmul.mubr.f32.gmra.mrb[0].mxu0 %v1040
        %v1341 = vpop.f32.mrb[0].mxu0
        %v1342 = vadd.f32 %v980, %v1341
        %v1343 = vpop.f32.mrb[0].mxu0
        %v1344 = vadd.f32 %v980, %v1343
        %1345 = vmatprep.mubr.f32.mxu0 0.0
        %1346 = vmatmul.mubr.f32.gmra.mrb[0].mxu0 %v1043
        %v1347 = vpop.f32.mrb[0].mxu0
        %v1348 = vadd.f32 %v985, %v1347
        %v1349 = vpop.f32.mrb[0].mxu0
        %v1350 = vadd.f32 %v985, %v1349
        %1351 = vmatprep.mubr.f32.mxu0 0.0
        %1352 = vmatmul.mubr.f32.gmra.mrb[0].mxu0 %v1046
        %v1353 = vpop.f32.mrb[0].mxu0
        %v1354 = vadd.f32 %v990, %v1353
        %v1355 = vpop.f32.mrb[0].mxu0
        %v1356 = vadd.f32 %v990, %v1355
        %1357 = vmatprep.mubr.f32.mxu0 0.0
        %1358 = vmatmul.mubr.f32.gmra.mrb[0].mxu0 %v1049
        %v1359 = vpop.f32.mrb[0].mxu0
        %v1360 = vadd.f32 %v995, %v1359
        %v1361 = vpop.f32.mrb[0].mxu0
        %v1362 = vadd.f32 %v995, %v1361
        %1363 = vmatprep.mubr.f32.mxu0 0.0
        %1364 = vmatmul.mubr.f32.gmra.mrb[0].mxu0 %v1052
        %v1365 = vpop.f32.mrb[0].mxu0
        %v1366 = vadd.f32 %v1000, %v1365
        %v1367 = vpop.f32.mrb[0].mxu0
        %v1368 = vadd.f32 %v1000, %v1367
        %1369 = vmatprep.mubr.f32.mxu0 0.0
        %1370 = vmatmul.mubr.f32.gmra.mrb[0].mxu0 %v1055
        %v1371 = vpop.f32.mrb[0].mxu0
        %v1372 = vadd.f32 %v1005, %v1371
        %v1373 = vpop.f32.mrb[0].mxu0
        %v1374 = vadd.f32 %v1005, %v1373
        %1375 = vmatprep.mubr.f32.mxu0 0.0
        %1376 = vmatmul.mubr.f32.gmra.mrb[0].mxu0 %v1058
        %v1377 = vpop.f32.mrb[0].mxu0
        %v1378 = vadd.f32 %v1010, %v1377
        %v1379 = vpop.f32.mrb[0].mxu0
        %v1380 = vadd.f32 %v1010, %v1379
        %1381 = vdwg.mxu0
        %v1382 = vld [vmem:[%s5] sm:$0xff]
        %v1383 = vld [vmem:[%s5 + $0x8] sm:$0xff]
        %v1384 = vld [vmem:[%s6] sm:$0xff]
        %v1385 = vld [vmem:[%s6 + $0x8] sm:$0xff]
        %1387 = vset.pattern.permute.xlu0 0
        %1388 = vperm.xlu0 %1387, %v1384
        %v1389 = vpop.permute.xlu0 %1388
        %1392 = vset.pattern.permute.xlu0 0
        %1393 = vperm.xlu0 %1392, %v1385
        %v1394 = vpop.permute.xlu0 %1393
        %v1397 = vsel %vm529, %v1382, 0
        %v1400 = vsel %vm529, %v1383, 0
        %1402 = vmatprep.subr.mxu0 %v410
        %1403 = vmatpush1.msra.mxu0 %v409
        %1404 = vmatprep.subr.mxu0 %v414
        %1405 = vmatpush1.msra.mxu0 %v413
        %1406 = vmatprep.subr.mxu0 0.0
        %1407 = vmatpush1.msra.mxu0 0.0
        %1408 = vmatprep.subr.mxu0 0.0
        %1409 = vmatpush1.msra.mxu0 0.0
        %1410 = vmatprep.subr.mxu0 0.0
        %1411 = vmatpush1.msra.mxu0 0.0
        %1412 = vmatprep.subr.mxu0 0.0
        %1413 = vmatpush1.msra.mxu0 0.0
        %1414 = vmatprep.subr.mxu0 0.0
        %1415 = vmatpush1.msra.mxu0 0.0
        %1416 = vmatprep.subr.mxu0 0.0
        %1417 = vmatpush1.msra.mxu0 0.0
        %1418 = vmatprep.subr.mxu0 0.0
        %1419 = vmatpush1.msra.mxu0 0.0
        %1420 = vmatprep.subr.mxu0 0.0
        %1421 = vmatpush1.msra.mxu0 0.0
        %1422 = vmatprep.subr.mxu0 0.0
        %1423 = vmatpush1.msra.mxu0 0.0
        %1424 = vmatprep.subr.mxu0 0.0
        %1425 = vmatpush1.msra.mxu0 0.0
        %1426 = vmatprep.subr.mxu0 0.0
        %1427 = vmatpush1.msra.mxu0 0.0
        %1428 = vmatprep.subr.mxu0 0.0
        %1429 = vmatpush1.msra.mxu0 0.0
        %1430 = vmatprep.subr.mxu0 0.0
        %1431 = vmatpush1.msra.mxu0 0.0
        %1432 = vmatprep.subr.mxu0 0.0
        %1433 = vmatpush1.msra.mxu0 0.0
        %1434 = vmatprep.subr.mxu0 0.0
        %1435 = vmatpush1.msra.mxu0 0.0
        %1436 = vmatprep.subr.mxu0 0.0
        %1437 = vmatpush1.msra.mxu0 0.0
        %1438 = vmatprep.subr.mxu0 0.0
        %1439 = vmatpush1.msra.mxu0 0.0
        %1440 = vmatprep.subr.mxu0 0.0
        %1441 = vmatpush1.msra.mxu0 0.0
        %1442 = vmatprep.subr.mxu0 0.0
        %1443 = vmatpush1.msra.mxu0 0.0
        %1444 = vmatprep.subr.mxu0 0.0
        %1445 = vmatpush1.msra.mxu0 0.0
        %1446 = vmatprep.subr.mxu0 0.0
        %1447 = vmatpush1.msra.mxu0 0.0
        %1448 = vmatprep.subr.mxu0 0.0
        %1449 = vmatpush1.msra.mxu0 0.0
        %1450 = vmatprep.subr.mxu0 0.0
        %1451 = vmatpush1.msra.mxu0 0.0
        %1452 = vmatprep.subr.mxu0 0.0
        %1453 = vmatpush1.msra.mxu0 0.0
        %1454 = vmatprep.subr.mxu0 0.0
        %1455 = vmatpush1.msra.mxu0 0.0
        %1456 = vmatprep.subr.mxu0 0.0
        %1457 = vmatpush1.msra.mxu0 0.0
        %1458 = vmatprep.subr.mxu0 0.0
        %1459 = vmatpush1.msra.mxu0 0.0
        %1460 = vmatprep.subr.mxu0 0.0
        %1461 = vmatpush1.msra.mxu0 0.0
        %1462 = vmatprep.subr.mxu0 0.0
        %1463 = vmatpush1.msra.mxu0 0.0
        %1464 = vmatprep.subr.mxu0 0.0
        %1465 = vmatpush1.msra.mxu0 0.0
        %1466 = vmatprep.mubr.f32.mxu0 0.0
        %1467 = vmatmul.mubr.f32.gmra.mrb[0].mxu0 %v1397
        %v1468 = vpop.f32.mrb[0].mxu0
        %v1469 = vadd.f32 %v1389, %v1468
        %v1470 = vpop.f32.mrb[0].mxu0
        %v1471 = vadd.f32 %v1389, %v1470
        %1472 = vmatprep.mubr.f32.mxu0 0.0
        %1473 = vmatmul.mubr.f32.gmra.mrb[0].mxu0 %v1400
        %v1474 = vpop.f32.mrb[0].mxu0
        %v1475 = vadd.f32 %v1394, %v1474
        %v1476 = vpop.f32.mrb[0].mxu0
        %v1477 = vadd.f32 %v1394, %v1476
        %1478 = vdwg.mxu0
        %1479 = vmatprep.subr.mxu0 %v412
        %1480 = vmatpush1.msra.mxu0 %v411
        %1481 = vmatprep.subr.mxu0 %v416
        %1482 = vmatpush1.msra.mxu0 %v415
        %1483 = vmatprep.subr.mxu0 0.0
        %1484 = vmatpush1.msra.mxu0 0.0
        %1485 = vmatprep.subr.mxu0 0.0
        %1486 = vmatpush1.msra.mxu0 0.0
        %1487 = vmatprep.subr.mxu0 0.0
        %1488 = vmatpush1.msra.mxu0 0.0
        %1489 = vmatprep.subr.mxu0 0.0
        %1490 = vmatpush1.msra.mxu0 0.0
        %1491 = vmatprep.subr.mxu0 0.0
        %1492 = vmatpush1.msra.mxu0 0.0
        %1493 = vmatprep.subr.mxu0 0.0
        %1494 = vmatpush1.msra.mxu0 0.0
        %1495 = vmatprep.subr.mxu0 0.0
        %1496 = vmatpush1.msra.mxu0 0.0
        %1497 = vmatprep.subr.mxu0 0.0
        %1498 = vmatpush1.msra.mxu0 0.0
        %1499 = vmatprep.subr.mxu0 0.0
        %1500 = vmatpush1.msra.mxu0 0.0
        %1501 = vmatprep.subr.mxu0 0.0
        %1502 = vmatpush1.msra.mxu0 0.0
        %1503 = vmatprep.subr.mxu0 0.0
        %1504 = vmatpush1.msra.mxu0 0.0
        %1505 = vmatprep.subr.mxu0 0.0
        %1506 = vmatpush1.msra.mxu0 0.0
        %1507 = vmatprep.subr.mxu0 0.0
        %1508 = vmatpush1.msra.mxu0 0.0
        %1509 = vmatprep.subr.mxu0 0.0
        %1510 = vmatpush1.msra.mxu0 0.0
        %1511 = vmatprep.subr.mxu0 0.0
        %1512 = vmatpush1.msra.mxu0 0.0
        %1513 = vmatprep.subr.mxu0 0.0
        %1514 = vmatpush1.msra.mxu0 0.0
        %1515 = vmatprep.subr.mxu0 0.0
        %1516 = vmatpush1.msra.mxu0 0.0
        %1517 = vmatprep.subr.mxu0 0.0
        %1518 = vmatpush1.msra.mxu0 0.0
        %1519 = vmatprep.subr.mxu0 0.0
        %1520 = vmatpush1.msra.mxu0 0.0
        %1521 = vmatprep.subr.mxu0 0.0
        %1522 = vmatpush1.msra.mxu0 0.0
        %1523 = vmatprep.subr.mxu0 0.0
        %1524 = vmatpush1.msra.mxu0 0.0
        %1525 = vmatprep.subr.mxu0 0.0
        %1526 = vmatpush1.msra.mxu0 0.0
        %1527 = vmatprep.subr.mxu0 0.0
        %1528 = vmatpush1.msra.mxu0 0.0
        %1529 = vmatprep.subr.mxu0 0.0
        %1530 = vmatpush1.msra.mxu0 0.0
        %1531 = vmatprep.subr.mxu0 0.0
        %1532 = vmatpush1.msra.mxu0 0.0
        %1533 = vmatprep.subr.mxu0 0.0
        %1534 = vmatpush1.msra.mxu0 0.0
        %1535 = vmatprep.subr.mxu0 0.0
        %1536 = vmatpush1.msra.mxu0 0.0
        %1537 = vmatprep.subr.mxu0 0.0
        %1538 = vmatpush1.msra.mxu0 0.0
        %1539 = vmatprep.subr.mxu0 0.0
        %1540 = vmatpush1.msra.mxu0 0.0
        %1541 = vmatprep.subr.mxu0 0.0
        %1542 = vmatpush1.msra.mxu0 0.0
        %1543 = vmatprep.mubr.f32.mxu0 0.0
        %1544 = vmatmul.mubr.f32.gmra.mrb[0].mxu0 %v1397
        %v1545 = vpop.f32.mrb[0].mxu0
        %v1546 = vadd.f32 %v1389, %v1545
        %v1547 = vpop.f32.mrb[0].mxu0
        %v1548 = vadd.f32 %v1389, %v1547
        %1549 = vmatprep.mubr.f32.mxu0 0.0
        %1550 = vmatmul.mubr.f32.gmra.mrb[0].mxu0 %v1400
        %v1551 = vpop.f32.mrb[0].mxu0
        %v1552 = vadd.f32 %v1394, %v1551
        %v1553 = vpop.f32.mrb[0].mxu0
        %v1554 = vadd.f32 %v1394, %v1553
        %1555 = vdwg.mxu0
        %v1556 = vpack.c.bf16 %v651, %v645
        %v1557 = vpack.c.bf16 %v653, %v647
        %v1558 = vpack.c.bf16 %v812, %v806
        %v1559 = vpack.c.bf16 %v814, %v808
        %v1560 = vpack.c.bf16 %v663, %v657
        %v1561 = vpack.c.bf16 %v665, %v659
        %v1562 = vpack.c.bf16 %v824, %v818
        %v1563 = vpack.c.bf16 %v826, %v820
        %v1564 = vpack.c.bf16 %v675, %v669
        %v1565 = vpack.c.bf16 %v677, %v671
        %v1566 = vpack.c.bf16 %v836, %v830
        %v1567 = vpack.c.bf16 %v838, %v832
        %v1568 = vpack.c.bf16 %v687, %v681
        %v1569 = vpack.c.bf16 %v689, %v683
        %v1570 = vpack.c.bf16 %v848, %v842
        %v1571 = vpack.c.bf16 %v850, %v844
        %v1572 = vpack.c.bf16 %v699, %v693
        %v1573 = vpack.c.bf16 %v701, %v695
        %v1574 = vpack.c.bf16 %v860, %v854
        %v1575 = vpack.c.bf16 %v862, %v856
        %v1576 = vpack.c.bf16 %v711, %v705
        %v1577 = vpack.c.bf16 %v713, %v707
        %v1578 = vpack.c.bf16 %v872, %v866
        %v1579 = vpack.c.bf16 %v874, %v868
        %v1580 = vpack.c.bf16 %v723, %v717
        %v1581 = vpack.c.bf16 %v725, %v719
        %v1582 = vpack.c.bf16 %v884, %v878
        %v1583 = vpack.c.bf16 %v886, %v880
        %v1584 = vpack.c.bf16 %v735, %v729
        %v1585 = vpack.c.bf16 %v737, %v731
        %v1586 = vpack.c.bf16 %v896, %v890
        %v1587 = vpack.c.bf16 %v898, %v892
        %v1620 = vunpack.c.l.b16 %v1556
        %v1621 = vunpack.c.l.b16 %v1557
        %v1622 = vunpack.c.l.b16 %v1558
        %v1623 = vunpack.c.l.b16 %v1559
        %v1624 = vunpack.c.h.b16 %v1556
        %v1625 = vunpack.c.h.b16 %v1557
        %v1626 = vunpack.c.h.b16 %v1558
        %v1627 = vunpack.c.h.b16 %v1559
        %v1628 = vunpack.c.l.b16 %v1560
        %v1629 = vunpack.c.l.b16 %v1561
        %v1630 = vunpack.c.l.b16 %v1562
        %v1631 = vunpack.c.l.b16 %v1563
        %v1632 = vunpack.c.h.b16 %v1560
        %v1633 = vunpack.c.h.b16 %v1561
        %v1634 = vunpack.c.h.b16 %v1562
        %v1635 = vunpack.c.h.b16 %v1563
        %v1636 = vunpack.c.l.b16 %v1564
        %v1637 = vunpack.c.l.b16 %v1565
        %v1638 = vunpack.c.l.b16 %v1566
        %v1639 = vunpack.c.l.b16 %v1567
        %v1640 = vunpack.c.h.b16 %v1564
        %v1641 = vunpack.c.h.b16 %v1565
        %v1642 = vunpack.c.h.b16 %v1566
        %v1643 = vunpack.c.h.b16 %v1567
        %v1644 = vunpack.c.l.b16 %v1568
        %v1645 = vunpack.c.l.b16 %v1569
        %v1646 = vunpack.c.l.b16 %v1570
        %v1647 = vunpack.c.l.b16 %v1571
        %v1648 = vunpack.c.h.b16 %v1568
        %v1649 = vunpack.c.h.b16 %v1569
        %v1650 = vunpack.c.h.b16 %v1570
        %v1651 = vunpack.c.h.b16 %v1571
        %v1652 = vunpack.c.l.b16 %v1572
        %v1653 = vunpack.c.l.b16 %v1573
        %v1654 = vunpack.c.l.b16 %v1574
        %v1655 = vunpack.c.l.b16 %v1575
        %v1656 = vunpack.c.h.b16 %v1572
        %v1657 = vunpack.c.h.b16 %v1573
        %v1658 = vunpack.c.h.b16 %v1574
        %v1659 = vunpack.c.h.b16 %v1575
        %v1660 = vunpack.c.l.b16 %v1576
        %v1661 = vunpack.c.l.b16 %v1577
        %v1662 = vunpack.c.l.b16 %v1578
        %v1663 = vunpack.c.l.b16 %v1579
        %v1664 = vunpack.c.h.b16 %v1576
        %v1665 = vunpack.c.h.b16 %v1577
        %v1666 = vunpack.c.h.b16 %v1578
        %v1667 = vunpack.c.h.b16 %v1579
        %v1668 = vunpack.c.l.b16 %v1580
        %v1669 = vunpack.c.l.b16 %v1581
        %v1670 = vunpack.c.l.b16 %v1582
        %v1671 = vunpack.c.l.b16 %v1583
        %v1672 = vunpack.c.h.b16 %v1580
        %v1673 = vunpack.c.h.b16 %v1581
        %v1674 = vunpack.c.h.b16 %v1582
        %v1675 = vunpack.c.h.b16 %v1583
        %v1676 = vunpack.c.l.b16 %v1584
        %v1677 = vunpack.c.l.b16 %v1585
        %v1678 = vunpack.c.l.b16 %v1586
        %v1679 = vunpack.c.l.b16 %v1587
        %v1680 = vunpack.c.h.b16 %v1584
        %v1681 = vunpack.c.h.b16 %v1585
        %v1682 = vunpack.c.h.b16 %v1586
        %v1683 = vunpack.c.h.b16 %v1587
        %v1684 = vpack.c.b16 %v1621, %v1620
        %v1685 = vpack.c.b16 %v1623, %v1622
        %v1686 = vpack.c.b16 %v1625, %v1624
        %v1687 = vpack.c.b16 %v1627, %v1626
        %v1688 = vpack.c.b16 %v1629, %v1628
        %v1689 = vpack.c.b16 %v1631, %v1630
        %v1690 = vpack.c.b16 %v1633, %v1632
        %v1691 = vpack.c.b16 %v1635, %v1634
        %v1692 = vpack.c.b16 %v1637, %v1636
        %v1693 = vpack.c.b16 %v1639, %v1638
        %v1694 = vpack.c.b16 %v1641, %v1640
        %v1695 = vpack.c.b16 %v1643, %v1642
        %v1696 = vpack.c.b16 %v1645, %v1644
        %v1697 = vpack.c.b16 %v1647, %v1646
        %v1698 = vpack.c.b16 %v1649, %v1648
        %v1699 = vpack.c.b16 %v1651, %v1650
        %v1700 = vpack.c.b16 %v1653, %v1652
        %v1701 = vpack.c.b16 %v1655, %v1654
        %v1702 = vpack.c.b16 %v1657, %v1656
        %v1703 = vpack.c.b16 %v1659, %v1658
        %v1704 = vpack.c.b16 %v1661, %v1660
        %v1705 = vpack.c.b16 %v1663, %v1662
        %v1706 = vpack.c.b16 %v1665, %v1664
        %v1707 = vpack.c.b16 %v1667, %v1666
        %v1708 = vpack.c.b16 %v1669, %v1668
        %v1709 = vpack.c.b16 %v1671, %v1670
        %v1710 = vpack.c.b16 %v1673, %v1672
        %v1711 = vpack.c.b16 %v1675, %v1674
        %v1712 = vpack.c.b16 %v1677, %v1676
        %v1713 = vpack.c.b16 %v1679, %v1678
        %v1714 = vpack.c.b16 %v1681, %v1680
        %v1715 = vpack.c.b16 %v1683, %v1682
        %1748 = vst [vmem:[%s390] sm:$0xff] %v1684
        %1749 = vst [vmem:[%s390 + $0x8] sm:$0xff] %v1685
        %1750 = vst [vmem:[%s390 + $0x10] sm:$0xff] %v1686
        %1751 = vst [vmem:[%s390 + $0x18] sm:$0xff] %v1687
        %1752 = vst [vmem:[%s390 + $0x20] sm:$0xff] %v1688
        %1753 = vst [vmem:[%s390 + $0x28] sm:$0xff] %v1689
        %1754 = vst [vmem:[%s390 + $0x30] sm:$0xff] %v1690
        %1755 = vst [vmem:[%s390 + $0x38] sm:$0xff] %v1691
        %1756 = vst [vmem:[%s390 + $0x40] sm:$0xff] %v1692
        %1757 = vst [vmem:[%s390 + $0x48] sm:$0xff] %v1693
        %1758 = vst [vmem:[%s390 + $0x50] sm:$0xff] %v1694
        %1759 = vst [vmem:[%s390 + $0x58] sm:$0xff] %v1695
        %1760 = vst [vmem:[%s390 + $0x60] sm:$0xff] %v1696
        %1761 = vst [vmem:[%s390 + $0x68] sm:$0xff] %v1697
        %1762 = vst [vmem:[%s390 + $0x70] sm:$0xff] %v1698
        %1763 = vst [vmem:[%s390 + $0x78] sm:$0xff] %v1699
        %1764 = vst [vmem:[%s390 + $0x80] sm:$0xff] %v1700
        %1765 = vst [vmem:[%s390 + $0x88] sm:$0xff] %v1701
        %1766 = vst [vmem:[%s390 + $0x90] sm:$0xff] %v1702
        %1767 = vst [vmem:[%s390 + $0x98] sm:$0xff] %v1703
        %1768 = vst [vmem:[%s390 + $0xa0] sm:$0xff] %v1704
        %1769 = vst [vmem:[%s390 + $0xa8] sm:$0xff] %v1705
        %1770 = vst [vmem:[%s390 + $0xb0] sm:$0xff] %v1706
        %1771 = vst [vmem:[%s390 + $0xb8] sm:$0xff] %v1707
        %1772 = vst [vmem:[%s390 + $0xc0] sm:$0xff] %v1708
        %1773 = vst [vmem:[%s390 + $0xc8] sm:$0xff] %v1709
        %1774 = vst [vmem:[%s390 + $0xd0] sm:$0xff] %v1710
        %1775 = vst [vmem:[%s390 + $0xd8] sm:$0xff] %v1711
        %1776 = vst [vmem:[%s390 + $0xe0] sm:$0xff] %v1712
        %1777 = vst [vmem:[%s390 + $0xe8] sm:$0xff] %v1713
        %1778 = vst [vmem:[%s390 + $0xf0] sm:$0xff] %v1714
        %1779 = vst [vmem:[%s390 + $0xf8] sm:$0xff] %v1715
        %1780 = vxpose.xlu0.b32.start [1/16] %v1127, 128
        %1781 = vxpose.xlu0.b32.cont [2/16] %v1133, 128
        %1782 = vxpose.xlu0.b32.cont [3/16] %v1139, 128
        %1783 = vxpose.xlu0.b32.cont [4/16] %v1145, 128
        %1784 = vxpose.xlu0.b32.cont [5/16] %v1151, 128
        %1785 = vxpose.xlu0.b32.cont [6/16] %v1157, 128
        %1786 = vxpose.xlu0.b32.cont [7/16] %v1163, 128
        %1787 = vxpose.xlu0.b32.cont [8/16] %v1169, 128
        %1788 = vxpose.xlu0.b32.cont [9/16] %v1175, 128
        %1789 = vxpose.xlu0.b32.cont [10/16] %v1181, 128
        %1790 = vxpose.xlu0.b32.cont [11/16] %v1187, 128
        %1791 = vxpose.xlu0.b32.cont [12/16] %v1193, 128
        %1792 = vxpose.xlu0.b32.cont [13/16] %v1199, 128
        %1793 = vxpose.xlu0.b32.cont [14/16] %v1205, 128
        %1794 = vxpose.xlu0.b32.cont [15/16] %v1211, 128
        %1795 = vxpose.xlu0.b32.end [16/16] %v1217, 128
        %v1796 = vpop.trf.xlu0
        %v1797 = vpop.trf.xlu0
        %v1798 = vpop.trf.xlu0
        %v1799 = vpop.trf.xlu0
        %v1800 = vpop.trf.xlu0
        %v1801 = vpop.trf.xlu0
        %v1802 = vpop.trf.xlu0
        %v1803 = vpop.trf.xlu0
        %v1804 = vpop.trf.xlu0
        %v1805 = vpop.trf.xlu0
        %v1806 = vpop.trf.xlu0
        %v1807 = vpop.trf.xlu0
        %v1808 = vpop.trf.xlu0
        %v1809 = vpop.trf.xlu0
        %v1810 = vpop.trf.xlu0
        %v1811 = vpop.trf.xlu0
        %1812 = vxpose.xlu0.b32.start [1/16] %v1129, 128
        %1813 = vxpose.xlu0.b32.cont [2/16] %v1135, 128
        %1814 = vxpose.xlu0.b32.cont [3/16] %v1141, 128
        %1815 = vxpose.xlu0.b32.cont [4/16] %v1147, 128
        %1816 = vxpose.xlu0.b32.cont [5/16] %v1153, 128
        %1817 = vxpose.xlu0.b32.cont [6/16] %v1159, 128
        %1818 = vxpose.xlu0.b32.cont [7/16] %v1165, 128
        %1819 = vxpose.xlu0.b32.cont [8/16] %v1171, 128
        %1820 = vxpose.xlu0.b32.cont [9/16] %v1177, 128
        %1821 = vxpose.xlu0.b32.cont [10/16] %v1183, 128
        %1822 = vxpose.xlu0.b32.cont [11/16] %v1189, 128
        %1823 = vxpose.xlu0.b32.cont [12/16] %v1195, 128
        %1824 = vxpose.xlu0.b32.cont [13/16] %v1201, 128
        %1825 = vxpose.xlu0.b32.cont [14/16] %v1207, 128
        %1826 = vxpose.xlu0.b32.cont [15/16] %v1213, 128
        %1827 = vxpose.xlu0.b32.end [16/16] %v1219, 128
        %v1828 = vpop.trf.xlu0
        %v1829 = vpop.trf.xlu0
        %v1830 = vpop.trf.xlu0
        %v1831 = vpop.trf.xlu0
        %v1832 = vpop.trf.xlu0
        %v1833 = vpop.trf.xlu0
        %v1834 = vpop.trf.xlu0
        %v1835 = vpop.trf.xlu0
        %v1836 = vpop.trf.xlu0
        %v1837 = vpop.trf.xlu0
        %v1838 = vpop.trf.xlu0
        %v1839 = vpop.trf.xlu0
        %v1840 = vpop.trf.xlu0
        %v1841 = vpop.trf.xlu0
        %v1842 = vpop.trf.xlu0
        %v1843 = vpop.trf.xlu0
        %1844 = vxpose.xlu0.b32.start [1/16] %v1288, 128
        %1845 = vxpose.xlu0.b32.cont [2/16] %v1294, 128
        %1846 = vxpose.xlu0.b32.cont [3/16] %v1300, 128
        %1847 = vxpose.xlu0.b32.cont [4/16] %v1306, 128
        %1848 = vxpose.xlu0.b32.cont [5/16] %v1312, 128
        %1849 = vxpose.xlu0.b32.cont [6/16] %v1318, 128
        %1850 = vxpose.xlu0.b32.cont [7/16] %v1324, 128
        %1851 = vxpose.xlu0.b32.cont [8/16] %v1330, 128
        %1852 = vxpose.xlu0.b32.cont [9/16] %v1336, 128
        %1853 = vxpose.xlu0.b32.cont [10/16] %v1342, 128
        %1854 = vxpose.xlu0.b32.cont [11/16] %v1348, 128
        %1855 = vxpose.xlu0.b32.cont [12/16] %v1354, 128
        %1856 = vxpose.xlu0.b32.cont [13/16] %v1360, 128
        %1857 = vxpose.xlu0.b32.cont [14/16] %v1366, 128
        %1858 = vxpose.xlu0.b32.cont [15/16] %v1372, 128
        %1859 = vxpose.xlu0.b32.end [16/16] %v1378, 128
        %v1860 = vpop.trf.xlu0
        %v1861 = vpop.trf.xlu0
        %v1862 = vpop.trf.xlu0
        %v1863 = vpop.trf.xlu0
        %v1864 = vpop.trf.xlu0
        %v1865 = vpop.trf.xlu0
        %v1866 = vpop.trf.xlu0
        %v1867 = vpop.trf.xlu0
        %v1868 = vpop.trf.xlu0
        %v1869 = vpop.trf.xlu0
        %v1870 = vpop.trf.xlu0
        %v1871 = vpop.trf.xlu0
        %v1872 = vpop.trf.xlu0
        %v1873 = vpop.trf.xlu0
        %v1874 = vpop.trf.xlu0
        %v1875 = vpop.trf.xlu0
        %1876 = vxpose.xlu0.b32.start [1/16] %v1290, 128
        %1877 = vxpose.xlu0.b32.cont [2/16] %v1296, 128
        %1878 = vxpose.xlu0.b32.cont [3/16] %v1302, 128
        %1879 = vxpose.xlu0.b32.cont [4/16] %v1308, 128
        %1880 = vxpose.xlu0.b32.cont [5/16] %v1314, 128
        %1881 = vxpose.xlu0.b32.cont [6/16] %v1320, 128
        %1882 = vxpose.xlu0.b32.cont [7/16] %v1326, 128
        %1883 = vxpose.xlu0.b32.cont [8/16] %v1332, 128
        %1884 = vxpose.xlu0.b32.cont [9/16] %v1338, 128
        %1885 = vxpose.xlu0.b32.cont [10/16] %v1344, 128
        %1886 = vxpose.xlu0.b32.cont [11/16] %v1350, 128
        %1887 = vxpose.xlu0.b32.cont [12/16] %v1356, 128
        %1888 = vxpose.xlu0.b32.cont [13/16] %v1362, 128
        %1889 = vxpose.xlu0.b32.cont [14/16] %v1368, 128
        %1890 = vxpose.xlu0.b32.cont [15/16] %v1374, 128
        %1891 = vxpose.xlu0.b32.end [16/16] %v1380, 128
        %v1892 = vpop.trf.xlu0
        %v1893 = vpop.trf.xlu0
        %v1894 = vpop.trf.xlu0
        %v1895 = vpop.trf.xlu0
        %v1896 = vpop.trf.xlu0
        %v1897 = vpop.trf.xlu0
        %v1898 = vpop.trf.xlu0
        %v1899 = vpop.trf.xlu0
        %v1900 = vpop.trf.xlu0
        %v1901 = vpop.trf.xlu0
        %v1902 = vpop.trf.xlu0
        %v1903 = vpop.trf.xlu0
        %v1904 = vpop.trf.xlu0
        %v1905 = vpop.trf.xlu0
        %v1906 = vpop.trf.xlu0
        %v1907 = vpop.trf.xlu0
        %v1908 = vpack.c.bf16 %v1797, %v1796
        %v1909 = vpack.c.bf16 %v1799, %v1798
        %v1910 = vpack.c.bf16 %v1801, %v1800
        %v1911 = vpack.c.bf16 %v1803, %v1802
        %v1912 = vpack.c.bf16 %v1805, %v1804
        %v1913 = vpack.c.bf16 %v1807, %v1806
        %v1914 = vpack.c.bf16 %v1809, %v1808
        %v1915 = vpack.c.bf16 %v1811, %v1810
        %v1916 = vpack.c.bf16 %v1829, %v1828
        %v1917 = vpack.c.bf16 %v1831, %v1830
        %v1918 = vpack.c.bf16 %v1833, %v1832
        %v1919 = vpack.c.bf16 %v1835, %v1834
        %v1920 = vpack.c.bf16 %v1837, %v1836
        %v1921 = vpack.c.bf16 %v1839, %v1838
        %v1922 = vpack.c.bf16 %v1841, %v1840
        %v1923 = vpack.c.bf16 %v1843, %v1842
        %v1924 = vpack.c.bf16 %v1861, %v1860
        %v1925 = vpack.c.bf16 %v1863, %v1862
        %v1926 = vpack.c.bf16 %v1865, %v1864
        %v1927 = vpack.c.bf16 %v1867, %v1866
        %v1928 = vpack.c.bf16 %v1869, %v1868
        %v1929 = vpack.c.bf16 %v1871, %v1870
        %v1930 = vpack.c.bf16 %v1873, %v1872
        %v1931 = vpack.c.bf16 %v1875, %v1874
        %v1932 = vpack.c.bf16 %v1893, %v1892
        %v1933 = vpack.c.bf16 %v1895, %v1894
        %v1934 = vpack.c.bf16 %v1897, %v1896
        %v1935 = vpack.c.bf16 %v1899, %v1898
        %v1936 = vpack.c.bf16 %v1901, %v1900
        %v1937 = vpack.c.bf16 %v1903, %v1902
        %v1938 = vpack.c.bf16 %v1905, %v1904
        %v1939 = vpack.c.bf16 %v1907, %v1906
        %v1972 = vunpack.c.l.b16 %v1908
        %v1973 = vunpack.c.h.b16 %v1908
        %v1974 = vunpack.c.l.b16 %v1909
        %v1975 = vunpack.c.h.b16 %v1909
        %v1976 = vunpack.c.l.b16 %v1910
        %v1977 = vunpack.c.h.b16 %v1910
        %v1978 = vunpack.c.l.b16 %v1911
        %v1979 = vunpack.c.h.b16 %v1911
        %v1980 = vunpack.c.l.b16 %v1912
        %v1981 = vunpack.c.h.b16 %v1912
        %v1982 = vunpack.c.l.b16 %v1913
        %v1983 = vunpack.c.h.b16 %v1913
        %v1984 = vunpack.c.l.b16 %v1914
        %v1985 = vunpack.c.h.b16 %v1914
        %v1986 = vunpack.c.l.b16 %v1915
        %v1987 = vunpack.c.h.b16 %v1915
        %v1988 = vunpack.c.l.b16 %v1916
        %v1989 = vunpack.c.h.b16 %v1916
        %v1990 = vunpack.c.l.b16 %v1917
        %v1991 = vunpack.c.h.b16 %v1917
        %v1992 = vunpack.c.l.b16 %v1918
        %v1993 = vunpack.c.h.b16 %v1918
        %v1994 = vunpack.c.l.b16 %v1919
        %v1995 = vunpack.c.h.b16 %v1919
        %v1996 = vunpack.c.l.b16 %v1920
        %v1997 = vunpack.c.h.b16 %v1920
        %v1998 = vunpack.c.l.b16 %v1921
        %v1999 = vunpack.c.h.b16 %v1921
        %v2000 = vunpack.c.l.b16 %v1922
        %v2001 = vunpack.c.h.b16 %v1922
        %v2002 = vunpack.c.l.b16 %v1923
        %v2003 = vunpack.c.h.b16 %v1923
        %v2004 = vunpack.c.l.b16 %v1924
        %v2005 = vunpack.c.h.b16 %v1924
        %v2006 = vunpack.c.l.b16 %v1925
        %v2007 = vunpack.c.h.b16 %v1925
        %v2008 = vunpack.c.l.b16 %v1926
        %v2009 = vunpack.c.h.b16 %v1926
        %v2010 = vunpack.c.l.b16 %v1927
        %v2011 = vunpack.c.h.b16 %v1927
        %v2012 = vunpack.c.l.b16 %v1928
        %v2013 = vunpack.c.h.b16 %v1928
        %v2014 = vunpack.c.l.b16 %v1929
        %v2015 = vunpack.c.h.b16 %v1929
        %v2016 = vunpack.c.l.b16 %v1930
        %v2017 = vunpack.c.h.b16 %v1930
        %v2018 = vunpack.c.l.b16 %v1931
        %v2019 = vunpack.c.h.b16 %v1931
        %v2020 = vunpack.c.l.b16 %v1932
        %v2021 = vunpack.c.h.b16 %v1932
        %v2022 = vunpack.c.l.b16 %v1933
        %v2023 = vunpack.c.h.b16 %v1933
        %v2024 = vunpack.c.l.b16 %v1934
        %v2025 = vunpack.c.h.b16 %v1934
        %v2026 = vunpack.c.l.b16 %v1935
        %v2027 = vunpack.c.h.b16 %v1935
        %v2028 = vunpack.c.l.b16 %v1936
        %v2029 = vunpack.c.h.b16 %v1936
        %v2030 = vunpack.c.l.b16 %v1937
        %v2031 = vunpack.c.h.b16 %v1937
        %v2032 = vunpack.c.l.b16 %v1938
        %v2033 = vunpack.c.h.b16 %v1938
        %v2034 = vunpack.c.l.b16 %v1939
        %v2035 = vunpack.c.h.b16 %v1939
        %v2036 = vpack.c.b16 %v1972, %v1972
        %v2037 = vpack.c.b16 %v1973, %v1973
        %v2038 = vpack.c.b16 %v1974, %v1974
        %v2039 = vpack.c.b16 %v1975, %v1975
        %v2040 = vpack.c.b16 %v1976, %v1976
        %v2041 = vpack.c.b16 %v1977, %v1977
        %v2042 = vpack.c.b16 %v1978, %v1978
        %v2043 = vpack.c.b16 %v1979, %v1979
        %v2044 = vpack.c.b16 %v1980, %v1980
        %v2045 = vpack.c.b16 %v1981, %v1981
        %v2046 = vpack.c.b16 %v1982, %v1982
        %v2047 = vpack.c.b16 %v1983, %v1983
        %v2048 = vpack.c.b16 %v1984, %v1984
        %v2049 = vpack.c.b16 %v1985, %v1985
        %v2050 = vpack.c.b16 %v1986, %v1986
        %v2051 = vpack.c.b16 %v1987, %v1987
        %v2052 = vpack.c.b16 %v1988, %v1988
        %v2053 = vpack.c.b16 %v1989, %v1989
        %v2054 = vpack.c.b16 %v1990, %v1990
        %v2055 = vpack.c.b16 %v1991, %v1991
        %v2056 = vpack.c.b16 %v1992, %v1992
        %v2057 = vpack.c.b16 %v1993, %v1993
        %v2058 = vpack.c.b16 %v1994, %v1994
        %v2059 = vpack.c.b16 %v1995, %v1995
        %v2060 = vpack.c.b16 %v1996, %v1996
        %v2061 = vpack.c.b16 %v1997, %v1997
        %v2062 = vpack.c.b16 %v1998, %v1998
        %v2063 = vpack.c.b16 %v1999, %v1999
        %v2064 = vpack.c.b16 %v2000, %v2000
        %v2065 = vpack.c.b16 %v2001, %v2001
        %v2066 = vpack.c.b16 %v2002, %v2002
        %v2067 = vpack.c.b16 %v2003, %v2003
        %v2068 = vpack.c.b16 %v2004, %v2004
        %v2069 = vpack.c.b16 %v2005, %v2005
        %v2070 = vpack.c.b16 %v2006, %v2006
        %v2071 = vpack.c.b16 %v2007, %v2007
        %v2072 = vpack.c.b16 %v2008, %v2008
        %v2073 = vpack.c.b16 %v2009, %v2009
        %v2074 = vpack.c.b16 %v2010, %v2010
        %v2075 = vpack.c.b16 %v2011, %v2011
        %v2076 = vpack.c.b16 %v2012, %v2012
        %v2077 = vpack.c.b16 %v2013, %v2013
        %v2078 = vpack.c.b16 %v2014, %v2014
        %v2079 = vpack.c.b16 %v2015, %v2015
        %v2080 = vpack.c.b16 %v2016, %v2016
        %v2081 = vpack.c.b16 %v2017, %v2017
        %v2082 = vpack.c.b16 %v2018, %v2018
        %v2083 = vpack.c.b16 %v2019, %v2019
        %v2084 = vpack.c.b16 %v2020, %v2020
        %v2085 = vpack.c.b16 %v2021, %v2021
        %v2086 = vpack.c.b16 %v2022, %v2022
        %v2087 = vpack.c.b16 %v2023, %v2023
        %v2088 = vpack.c.b16 %v2024, %v2024
        %v2089 = vpack.c.b16 %v2025, %v2025
        %v2090 = vpack.c.b16 %v2026, %v2026
        %v2091 = vpack.c.b16 %v2027, %v2027
        %v2092 = vpack.c.b16 %v2028, %v2028
        %v2093 = vpack.c.b16 %v2029, %v2029
        %v2094 = vpack.c.b16 %v2030, %v2030
        %v2095 = vpack.c.b16 %v2031, %v2031
        %v2096 = vpack.c.b16 %v2032, %v2032
        %v2097 = vpack.c.b16 %v2033, %v2033
        %v2098 = vpack.c.b16 %v2034, %v2034
        %v2099 = vpack.c.b16 %v2035, %v2035
        %2164 = vst [vmem:[%s397] sm:$0xf] %v2036
        %2165 = vst [vmem:[%s397 + $0x4] sm:$0xf] %v2037
        %2166 = vst [vmem:[%s397 + $0x8] sm:$0xf] %v2038
        %2167 = vst [vmem:[%s397 + $0xc] sm:$0xf] %v2039
        %2168 = vst [vmem:[%s397 + $0x10] sm:$0xf] %v2040
        %2169 = vst [vmem:[%s397 + $0x14] sm:$0xf] %v2041
        %2170 = vst [vmem:[%s397 + $0x18] sm:$0xf] %v2042
        %2171 = vst [vmem:[%s397 + $0x1c] sm:$0xf] %v2043
        %2172 = vst [vmem:[%s397 + $0x20] sm:$0xf] %v2044
        %2173 = vst [vmem:[%s397 + $0x24] sm:$0xf] %v2045
        %2174 = vst [vmem:[%s397 + $0x28] sm:$0xf] %v2046
        %2175 = vst [vmem:[%s397 + $0x2c] sm:$0xf] %v2047
        %2176 = vst [vmem:[%s397 + $0x30] sm:$0xf] %v2048
        %2177 = vst [vmem:[%s397 + $0x34] sm:$0xf] %v2049
        %2178 = vst [vmem:[%s397 + $0x38] sm:$0xf] %v2050
        %2179 = vst [vmem:[%s397 + $0x3c] sm:$0xf] %v2051
        %2180 = vst [vmem:[%s397 + $0x40] sm:$0xf] %v2052
        %2181 = vst [vmem:[%s397 + $0x44] sm:$0xf] %v2053
        %2182 = vst [vmem:[%s397 + $0x48] sm:$0xf] %v2054
        %2183 = vst [vmem:[%s397 + $0x4c] sm:$0xf] %v2055
        %2184 = vst [vmem:[%s397 + $0x50] sm:$0xf] %v2056
        %2185 = vst [vmem:[%s397 + $0x54] sm:$0xf] %v2057
        %2186 = vst [vmem:[%s397 + $0x58] sm:$0xf] %v2058
        %2187 = vst [vmem:[%s397 + $0x5c] sm:$0xf] %v2059
        %2188 = vst [vmem:[%s397 + $0x60] sm:$0xf] %v2060
        %2189 = vst [vmem:[%s397 + $0x64] sm:$0xf] %v2061
        %2190 = vst [vmem:[%s397 + $0x68] sm:$0xf] %v2062
        %2191 = vst [vmem:[%s397 + $0x6c] sm:$0xf] %v2063
        %2192 = vst [vmem:[%s397 + $0x70] sm:$0xf] %v2064
        %2193 = vst [vmem:[%s397 + $0x74] sm:$0xf] %v2065
        %2194 = vst [vmem:[%s397 + $0x78] sm:$0xf] %v2066
        %2195 = vst [vmem:[%s397 + $0x7c] sm:$0xf] %v2067
        %2196 = vst [vmem:[%s397 + $0x80] sm:$0xf] %v2068
        %2197 = vst [vmem:[%s397 + $0x84] sm:$0xf] %v2069
        %2198 = vst [vmem:[%s397 + $0x88] sm:$0xf] %v2070
        %2199 = vst [vmem:[%s397 + $0x8c] sm:$0xf] %v2071
        %2200 = vst [vmem:[%s397 + $0x90] sm:$0xf] %v2072
        %2201 = vst [vmem:[%s397 + $0x94] sm:$0xf] %v2073
        %2202 = vst [vmem:[%s397 + $0x98] sm:$0xf] %v2074
        %2203 = vst [vmem:[%s397 + $0x9c] sm:$0xf] %v2075
        %2204 = vst [vmem:[%s397 + $0xa0] sm:$0xf] %v2076
        %2205 = vst [vmem:[%s397 + $0xa4] sm:$0xf] %v2077
        %2206 = vst [vmem:[%s397 + $0xa8] sm:$0xf] %v2078
        %2207 = vst [vmem:[%s397 + $0xac] sm:$0xf] %v2079
        %2208 = vst [vmem:[%s397 + $0xb0] sm:$0xf] %v2080
        %2209 = vst [vmem:[%s397 + $0xb4] sm:$0xf] %v2081
        %2210 = vst [vmem:[%s397 + $0xb8] sm:$0xf] %v2082
        %2211 = vst [vmem:[%s397 + $0xbc] sm:$0xf] %v2083
        %2212 = vst [vmem:[%s397 + $0xc0] sm:$0xf] %v2084
        %2213 = vst [vmem:[%s397 + $0xc4] sm:$0xf] %v2085
        %2214 = vst [vmem:[%s397 + $0xc8] sm:$0xf] %v2086
        %2215 = vst [vmem:[%s397 + $0xcc] sm:$0xf] %v2087
        %2216 = vst [vmem:[%s397 + $0xd0] sm:$0xf] %v2088
        %2217 = vst [vmem:[%s397 + $0xd4] sm:$0xf] %v2089
        %2218 = vst [vmem:[%s397 + $0xd8] sm:$0xf] %v2090
        %2219 = vst [vmem:[%s397 + $0xdc] sm:$0xf] %v2091
        %2220 = vst [vmem:[%s397 + $0xe0] sm:$0xf] %v2092
        %2221 = vst [vmem:[%s397 + $0xe4] sm:$0xf] %v2093
        %2222 = vst [vmem:[%s397 + $0xe8] sm:$0xf] %v2094
        %2223 = vst [vmem:[%s397 + $0xec] sm:$0xf] %v2095
        %2224 = vst [vmem:[%s397 + $0xf0] sm:$0xf] %v2096
        %2225 = vst [vmem:[%s397 + $0xf4] sm:$0xf] %v2097
        %2226 = vst [vmem:[%s397 + $0xf8] sm:$0xf] %v2098
        %2227 = vst [vmem:[%s397 + $0xfc] sm:$0xf] %v2099
        %v2228 = vpack.c.bf16 %v1475, %v1469
        %v2229 = vpack.c.bf16 %v1477, %v1471
        %v2230 = vpack.c.bf16 %v1552, %v1546
        %v2231 = vpack.c.bf16 %v1554, %v1548
        %v2236 = vunpack.c.l.b16 %v2228
        %v2237 = vunpack.c.l.b16 %v2229
        %v2238 = vunpack.c.l.b16 %v2230
        %v2239 = vunpack.c.l.b16 %v2231
        %v2240 = vunpack.c.h.b16 %v2228
        %v2241 = vunpack.c.h.b16 %v2229
        %v2242 = vunpack.c.h.b16 %v2230
        %v2243 = vunpack.c.h.b16 %v2231
        %v2244 = vpack.c.b16 %v2237, %v2236
        %v2245 = vpack.c.b16 %v2239, %v2238
        %v2246 = vpack.c.b16 %v2241, %v2240
        %v2247 = vpack.c.b16 %v2243, %v2242
        %2252 = vst [vmem:[%s404] sm:$0xff] %v2244
        %2253 = vst [vmem:[%s404 + $0x8] sm:$0xff] %v2245
        %2254 = vst [vmem:[%s404 + $0x10] sm:$0xff] %v2246
        %2255 = vst [vmem:[%s404 + $0x18] sm:$0xff] %v2247
        %s2256 = sand.u32 %s203, 1
        %s2257 = scalar_lea.sflag [#allocation4], %s2256
        %s2258 = sand.u32 %s203, 1
        %s2259 = smul.addr %s2258, 256
        %s2260 = scalar_lea.vmem [#allocation3], %s2259
        %s2261 = sand.u32 %s27, 1
        %s2262 = scalar_lea.sflag [#allocation6], %s2261
        %s2263 = sand.u32 %s231, 1
        %s2264 = smul.addr %s2263, 256
        %s2265 = scalar_lea.vmem [#allocation5], %s2264
        %s2266 = sand.u32 %s27, 1
        %s2267 = scalar_lea.sflag [#allocation6], %s2266
        %s2268 = sand.u32 %s259, 1
        %s2269 = smul.addr %s2268, 32
        %s2270 = scalar_lea.vmem [#allocation7], %s2269
        // Predicated region
        $region72: #{tpu_custom_call.1} parent=66 // pred_check
          %p2271 = pneg %p213
        $region73: #{tpu_custom_call.1} parent=66 // pred_check_branch
          %2273 = sbr.rel (%p2271) target = $region75
        $region74: #{tpu_custom_call.1} parent=66 // pred_region
          %s2274 = smul.u32 4, %s32
          %s2276 = ssub.s32 4096, 4096
          %2277 = vsyncadd %s2257, %s2276
          %s2278 = smul.addr %s31, 128
          %s2279 = sadd.s32 %s2274, %s2278
          %s2280 = smul.addr %s2279, 64
          %s2281 = scalar_lea.hbm %s7, %s2280
          %s2282 = sshll.u32 %s2260, 4
          %s2283 = int_to_ptr.vmem [resolvable:$true] %s2282
          %2288 = dma.vmem_to_hbm [thread:$0]  %s2283, 4096, %s2281, %s2257, 256, 512, 16
        $region75: #{tpu_custom_call.1} parent=66 // pred_fallthru
          _
        // Predicated region
        $region76: #{tpu_custom_call.1} parent=66 // pred_check
          %p2289 = pneg %p241
        $region77: #{tpu_custom_call.1} parent=66 // pred_check_branch
          %2291 = sbr.rel (%p2289) target = $region79
        $region78: #{tpu_custom_call.1} parent=66 // pred_region
          %s2292 = smul.u32 64, %s32
          %s2294 = ssub.s32 4096, 4096
          %2295 = vsyncadd %s2262, %s2294
          %s2296 = smul.addr %s31, 128
          %s2297 = sadd.s32 %s2292, %s2296
          %s2298 = smul.addr %s2297, 64
          %s2299 = scalar_lea.hbm %s8, %s2298
          %s2300 = sshll.u32 %s2265, 4
          %s2301 = int_to_ptr.vmem [resolvable:$true] %s2300
          %2306 = dma.vmem_to_hbm [thread:$0]  %s2301, 4096, %s2299, %s2262, 64, 64, 4
        $region79: #{tpu_custom_call.1} parent=66 // pred_fallthru
          _
        // Predicated region
        $region80: #{tpu_custom_call.1} parent=66 // pred_check
          %p2307 = pneg %p269
        $region81: #{tpu_custom_call.1} parent=66 // pred_check_branch
          %2309 = sbr.rel (%p2307) target = $region83
        $region82: #{tpu_custom_call.1} parent=66 // pred_region
          %s2310 = smul.u32 4, %s32
          %s2312 = ssub.s32 512, 512
          %2313 = vsyncadd %s2267, %s2312
          %s2314 = smul.addr %s31, 16
          %s2315 = sadd.s32 %s2310, %s2314
          %s2316 = smul.addr %s2315, 64
          %s2317 = scalar_lea.hbm %s9, %s2316
          %s2318 = sshll.u32 %s2270, 4
          %s2319 = int_to_ptr.vmem [resolvable:$true] %s2318
          %2324 = dma.vmem_to_hbm [thread:$0]  %s2319, 512, %s2317, %s2267, 256, 512, 16
        $region83: #{tpu_custom_call.1} parent=66 // pred_fallthru
          _
      $region67: #{tpu_custom_call.1} parent=5 // pred_fallthru
        _
      %p2325 = scmp.le.s32.totalorder 2, %s22
      // Predicated region
      $region84: #{tpu_custom_call.1} parent=5 // pred_check
        %p2326 = pneg %p2325
      $region85: #{tpu_custom_call.1} parent=5 // pred_check_branch
        %2328 = sbr.rel (%p2326) target = $region87
      $region86: #{tpu_custom_call.1} parent=5 // pred_region
        %s2329 = ssub.s32 %s22, 2
        // Predicated region
        $region88: #{tpu_custom_call.1} parent=86 // pred_check
          %p2330 = pneg %p219
        $region89: #{tpu_custom_call.1} parent=86 // pred_check_branch
          %2332 = sbr.rel (%p2330) target = $region91
        $region90: #{tpu_custom_call.1} parent=86 // pred_region
          %s2333 = sand.u32 %s204, 1
          %s2334 = scalar_lea.sflag [#allocation4], %s2333
          %s2335 = sand.u32 %s204, 1
          %s2336 = smul.addr %s2335, 256
          %s2337 = scalar_lea.vmem [#allocation3], %s2336
          %2338 = dma.done %s2334, 4096
        $region91: #{tpu_custom_call.1} parent=86 // pred_fallthru
          _
        // Predicated region
        $region92: #{tpu_custom_call.1} parent=86 // pred_check
          %p2339 = pneg %p247
        $region93: #{tpu_custom_call.1} parent=86 // pred_check_branch
          %2341 = sbr.rel (%p2339) target = $region95
        $region94: #{tpu_custom_call.1} parent=86 // pred_region
          %s2342 = sand.u32 %s28, 1
          %s2343 = scalar_lea.sflag [#allocation6], %s2342
          %s2344 = sand.u32 %s232, 1
          %s2345 = smul.addr %s2344, 256
          %s2346 = scalar_lea.vmem [#allocation5], %s2345
          %2347 = dma.done %s2343, 4096
        $region95: #{tpu_custom_call.1} parent=86 // pred_fallthru
          _
        // Predicated region
        $region96: #{tpu_custom_call.1} parent=86 // pred_check
          %p2348 = pneg %p275
        $region97: #{tpu_custom_call.1} parent=86 // pred_check_branch
          %2350 = sbr.rel (%p2348) target = $region99
        $region98: #{tpu_custom_call.1} parent=86 // pred_region
          %s2351 = sand.u32 %s28, 1
          %s2352 = scalar_lea.sflag [#allocation6], %s2351
          %s2353 = sand.u32 %s260, 1
          %s2354 = smul.addr %s2353, 32
          %s2355 = scalar_lea.vmem [#allocation7], %s2354
          %2356 = dma.done %s2352, 512
        $region99: #{tpu_custom_call.1} parent=86 // pred_fallthru
          _
      $region87: #{tpu_custom_call.1} parent=5 // pred_fallthru
        _
    $region6: #{tpu_custom_call.1} parent=1 // loop_footer
      %s26 = sadd.s32 1, %s22
    $region7: #{tpu_custom_call.1} parent=1 // loop_footer_branch
      %21 = sbr.rel target = $region3
    $region8: #{tpu_custom_call.1} parent=1 // loop_exit
      _
    %2357 = vsyncpa [#allocation4], 1
    %s2358 = scalar_lea.sflag [#allocation4], 1
    %2359 = vsyncpa %s2358, 1
    %2360 = vsyncpa [#allocation6], 1
    %s2361 = scalar_lea.sflag [#allocation6], 1
    %2362 = vsyncpa %s2361, 1

</llo_original>
